<compile_context>
chip_gen: v5e
topology: v5e:2x2
jax: 0.10.0
libtpu: 0.0.40
codegen_flags: <defaults>
</compile_context>

<pallas_src>
import functools

import jax
import jax.numpy as jnp
from jax import lax
from jax.experimental import pallas as pl
from jax.experimental.pallas import tpu as pltpu


# --------------------------------------------------------------------------
# Pallas kernel: all T decode steps in one invocation, everything VMEM-resident
# --------------------------------------------------------------------------
def _decoder_kernel(hidden_size, num_layers, num_steps,
                    emb_ref, hid0_ref, enc_ref,
                    wce_ref, wca_ref, bc_ref,
                    wih_ref, whh_ref, bih_ref, bhh_ref,
                    wout_ref, bout_ref,
                    out_ref, newhid_ref, attnw_ref,
                    xs_ref):
    f32 = jnp.float32
    bf16 = jnp.bfloat16
    H = hidden_size
    NL = num_layers
    T = num_steps

    # The (NL, 1, H) new-hidden output block is VMEM-resident for the whole
    # call and doubles as the recurrent carry.
    newhid_ref[...] = hid0_ref[...]

    # Loop-invariant loads hoisted out of the step loop.
    enc = enc_ref[...]                                   # (L, H) f32
    wce = wce_ref[...]                                   # (H, H) bf16
    wca = wca_ref[...]                                   # (H, H) bf16
    bc = bc_ref[...]                                     # (1, H) f32
    bih = bih_ref[...]                                   # (NL, 1, 3H) f32
    bhh = bhh_ref[...]                                   # (NL, 1, 3H) f32

    @pl.loop(0, T)
    def _(t):
        # ---- dot-product attention: softmax(hidden[0] @ enc^T) ------------
        h0 = newhid_ref[0]                               # (1, H) f32
        # Contract last dims directly -- no transposed (L, H) tile needed.
        scores = lax.dot_general(h0, enc, (((1,), (1,)), ((), ())),
                                 preferred_element_type=f32)          # (1, L)
        scores = scores - jnp.max(scores, axis=-1, keepdims=True)
        expd = jnp.exp(scores)
        denom = jnp.sum(expd, axis=-1, keepdims=True)
        attn = expd * pl.reciprocal(denom, approx=True)               # EUP slot
        attnw_ref[pl.ds(t, 1), :] = attn                 # VMEM row write
        attn_applied = jnp.dot(attn, enc, preferred_element_type=f32)  # (1, H)

        # ---- embedding row (gathered in the wrapper; dropout == identity) --
        emb = emb_ref[pl.ds(t, 1), :]                    # (1, H) f32

        # ---- attn_combine(cat(embedded, attn_applied)) + ReLU --------------
        # cat([e, a]) @ Wc^T == e @ Wce + a @ Wca ; bf16 MXU, f32 accumulate.
        comb = (jnp.dot(emb.astype(bf16), wce, preferred_element_type=f32)
                + jnp.dot(attn_applied.astype(bf16), wca,
                          preferred_element_type=f32)
                + bc)
        x = jnp.maximum(comb, 0.0)                       # (1, H) f32

        # ---- multi-layer GRU cell (PyTorch gate order r, z, n) -------------
        # Gates fused along the lane axis: one (1,H)@(H,3H) matmul per operand.
        for l in range(NL):
            h_prev = newhid_ref[l]                       # (1, H) f32
            gi = jnp.dot(x.astype(bf16), wih_ref[l],
                         preferred_element_type=f32) + bih[l]          # (1,3H)
            gh = jnp.dot(h_prev.astype(bf16), whh_ref[l],
                         preferred_element_type=f32) + bhh[l]          # (1,3H)
            r = jax.nn.sigmoid(gi[:, :H] + gh[:, :H])
            z = jax.nn.sigmoid(gi[:, H:2 * H] + gh[:, H:2 * H])
            n = jnp.tanh(gi[:, 2 * H:] + r * gh[:, 2 * H:])
            h_new = (1.0 - z) * n + z * h_prev
            newhid_ref[l] = h_new                        # update carry
            x = h_new                                    # input to next layer

        # Only the top-layer hidden feeds the output head; defer projection.
        xs_ref[pl.ds(t, 1), :] = x

    # ---- batched output projection + log_softmax (off the serial chain) ----
    xs = xs_ref[...]                                     # (T, H) f32
    logits = (jnp.dot(xs.astype(bf16), wout_ref[...],
                      preferred_element_type=f32) + bout_ref[...])     # (T, O)
    m = jnp.max(logits, axis=-1, keepdims=True)
    lse = m + jnp.log(jnp.sum(jnp.exp(logits - m), axis=-1, keepdims=True))
    out_ref[...] = logits - lse


# --------------------------------------------------------------------------
# One-time parameter preparation (transposes / gate fusion / casts hoisted here)
# --------------------------------------------------------------------------
def prepare_decoder_params(params, *, hidden_size, output_size, num_layers,
                           weight_dtype=jnp.bfloat16):
    H, O, NL = hidden_size, output_size, num_layers
    f32 = jnp.float32

    wc_t = params["wc"].astype(f32).T                    # (2H, H)
    # PyTorch GRU weight_ih/hh are (3H, H) with gates stacked [r, z, n] on
    # rows; transposing gives (H, 3H) with gates fused along the lane axis.
    wih = jnp.transpose(params["wih"], (0, 2, 1))        # (NL, H, 3H)
    whh = jnp.transpose(params["whh"], (0, 2, 1))        # (NL, H, 3H)

    return dict(
        emb=params["embedding"].astype(f32),             # (O, H) stays in HBM
        wce=wc_t[:H, :].astype(weight_dtype),            # (H, H) multiplies emb
        wca=wc_t[H:, :].astype(weight_dtype),            # (H, H) multiplies attn
        bc=params["bc"].reshape(1, H).astype(f32),
        wih=wih.astype(weight_dtype),                    # (NL, H, 3H)
        whh=whh.astype(weight_dtype),                    # (NL, H, 3H)
        bih=params["bih"].reshape(NL, 1, 3 * H).astype(f32),
        bhh=params["bhh"].reshape(NL, 1, 3 * H).astype(f32),
        wout=params["wout"].astype(weight_dtype).T,      # (H, O)
        bout=params["bout"].reshape(1, O).astype(f32),
    )


# --------------------------------------------------------------------------
# Wrapper: one pallas_call runs all T decode steps
# --------------------------------------------------------------------------
def multilayer_attn_decoder_decode(prep, tokens, hidden, encoder_outputs, *,
                                   hidden_size, output_size, num_layers,
                                   max_length):
    H, O, NL, L = hidden_size, output_size, num_layers, max_length
    T = tokens.shape[0]

    # Embedding gather hoisted to the wrapper: only the (T, H) rows actually
    # used enter VMEM, and jnp.take clamps out-of-range token ids.
    emb_seq = jnp.take(prep["emb"], tokens, axis=0)      # (T, H) f32

    kernel = functools.partial(_decoder_kernel, H, NL, T)
    vmem = pl.BlockSpec(memory_space=pltpu.MemorySpace.VMEM)  # whole array, 1-buffered

    out_shapes = (
        jax.ShapeDtypeStruct((T, O), jnp.float32),       # log-probs
        jax.ShapeDtypeStruct((NL, 1, H), jnp.float32),   # new hidden
        jax.ShapeDtypeStruct((T, L), jnp.float32),       # attention weights
    )

    return pl.pallas_call(
        kernel,
        out_shape=out_shapes,
        in_specs=[vmem] * 12,
        out_specs=(vmem, vmem, vmem),
        scratch_shapes=[pltpu.VMEM((T, H), jnp.float32)],  # top-layer hiddens
        compiler_params=pltpu.CompilerParams(
            # Explicit VMEM budget; at real H / O / NL re-derive this from the
            # bf16 weight footprint (and tile wout over vocab if it overflows).
            vmem_limit_bytes=32 * 1024 * 1024),
    )(emb_seq, hidden, encoder_outputs,
      prep["wce"], prep["wca"], prep["bc"],
      prep["wih"], prep["whh"], prep["bih"], prep["bhh"],
      prep["wout"], prep["bout"])


# --------------------------------------------------------------------------
# Pure-JAX reference (mirrors the PyTorch forward, eval mode), run T steps.
# Matmul inputs are rounded through bf16 exactly like the kernel's
# mixed-precision scheme so the comparison is apples-to-apples.
# --------------------------------------------------------------------------
def reference_decode(params, tokens, hidden, enc, H, NL,
                     weight_dtype=jnp.bfloat16):
    f32 = jnp.float32
    hi = lax.Precision.HIGHEST

    def mm(a, b):  # bf16 operands, f32 accumulation (matches kernel MXU use)
        return jnp.dot(a.astype(weight_dtype), b.astype(weight_dtype),
                       preferred_element_type=f32)

    wc_t = params["wc"].T                                # (2H, H)
    outs, attns = [], []
    for tok in tokens:
        emb = params["embedding"][tok].reshape(1, H)
        scores = jnp.dot(hidden[0], enc.T, precision=hi)
        attn = jax.nn.softmax(scores, axis=1)
        applied = jnp.dot(attn, enc, precision=hi)
        x = jnp.maximum(mm(emb, wc_t[:H]) + mm(applied, wc_t[H:])
                        + params["bc"], 0.0)
        hs = []
        for l in range(NL):
            gi = mm(x, params["wih"][l].T) + params["bih"][l]
            gh = mm(hidden[l], params["whh"][l].T) + params["bhh"][l]
            r = jax.nn.sigmoid(gi[:, :H] + gh[:, :H])
            z = jax.nn.sigmoid(gi[:, H:2 * H] + gh[:, H:2 * H])
            n = jnp.tanh(gi[:, 2 * H:] + r * gh[:, 2 * H:])
            h_new = (1.0 - z) * n + z * hidden[l]
            hs.append(h_new)
            x = h_new
        hidden = jnp.stack(hs)
        logits = mm(x, params["wout"].T) + params["bout"]
        outs.append(jax.nn.log_softmax(logits, axis=1))
        attns.append(attn)
    return jnp.concatenate(outs, 0), hidden, jnp.concatenate(attns, 0)


# --------------------------------------------------------------------------
if __name__ == "__main__":
    H, O, L, NL, T = 32, 16, 10, 8, 6   # hidden, vocab, max_length, layers, steps

    key = jax.random.PRNGKey(0)
    ks = jax.random.split(key, 12)
    params = {
        "embedding": jax.random.normal(ks[0], (O, H), jnp.float32) * 0.1,
        "wc":   jax.random.normal(ks[1], (H, 2 * H), jnp.float32) * 0.1,
        "bc":   jax.random.normal(ks[2], (H,), jnp.float32) * 0.1,
        "wih":  jax.random.normal(ks[3], (NL, 3 * H, H), jnp.float32) * 0.1,
        "whh":  jax.random.normal(ks[4], (NL, 3 * H, H), jnp.float32) * 0.1,
        "bih":  jax.random.normal(ks[5], (NL, 3 * H), jnp.float32) * 0.1,
        "bhh":  jax.random.normal(ks[6], (NL, 3 * H), jnp.float32) * 0.1,
        "wout": jax.random.normal(ks[7], (O, H), jnp.float32) * 0.1,
        "bout": jax.random.normal(ks[8], (O,), jnp.float32) * 0.1,
    }

    tokens = jax.random.randint(ks[11], (T,), 0, O).astype(jnp.int32)
    hidden = jax.random.normal(ks[9], (NL, 1, H), jnp.float32) * 0.1
    encoder_outputs = jax.random.normal(ks[10], (L, H), jnp.float32)

    # One-time parameter prep (all transposes / gate fusion / bf16 casts).
    prep = prepare_decoder_params(params, hidden_size=H, output_size=O,
                                  num_layers=NL)

    out, new_hidden, attn_w = multilayer_attn_decoder_decode(
        prep, tokens, hidden, encoder_outputs,
        hidden_size=H, output_size=O, num_layers=NL, max_length=L)
    jax.block_until_ready((out, new_hidden, attn_w))

    ref_out, ref_hid, ref_attn = reference_decode(
        params, tokens, hidden, encoder_outputs, H, NL)

    assert out.shape == (T, O)
    assert new_hidden.shape == (NL, 1, H)
    assert attn_w.shape == (T, L)
    assert jnp.allclose(out, ref_out, atol=5e-3, rtol=5e-3), "log-softmax mismatch"
    assert jnp.allclose(new_hidden, ref_hid, atol=5e-3, rtol=5e-3), "hidden mismatch"
    assert jnp.allclose(attn_w, ref_attn, atol=5e-3, rtol=5e-3), "attn mismatch"

    print("KERNEL_OK")
</pallas_src>

<mosaic_0001>
module attributes {stable_mosaic.version = 11 : i64} {
  func.func @_decoder_kernel(%arg0: memref<6x32xf32, #tpu.memory_space<vmem>>, %arg1: memref<8x1x32xf32, #tpu.memory_space<vmem>>, %arg2: memref<10x32xf32, #tpu.memory_space<vmem>>, %arg3: memref<32x32xbf16, #tpu.memory_space<vmem>>, %arg4: memref<32x32xbf16, #tpu.memory_space<vmem>>, %arg5: memref<1x32xf32, #tpu.memory_space<vmem>>, %arg6: memref<8x32x96xbf16, #tpu.memory_space<vmem>>, %arg7: memref<8x32x96xbf16, #tpu.memory_space<vmem>>, %arg8: memref<8x1x96xf32, #tpu.memory_space<vmem>>, %arg9: memref<8x1x96xf32, #tpu.memory_space<vmem>>, %arg10: memref<32x16xbf16, #tpu.memory_space<vmem>>, %arg11: memref<1x16xf32, #tpu.memory_space<vmem>>, %arg12: memref<6x16xf32, #tpu.memory_space<vmem>>, %arg13: memref<8x1x32xf32, #tpu.memory_space<vmem>>, %arg14: memref<6x10xf32, #tpu.memory_space<vmem>>, %arg15: memref<6x32xf32, #tpu.memory_space<vmem>>) attributes {dimension_semantics = [], scalar_prefetch = 0 : i64, scratch_operands = 1 : i64, tpu.core_type = #tpu.core_type<tc>} {
    %c0 = arith.constant 0 : index
    %c0_0 = arith.constant 0 : index
    %c0_1 = arith.constant 0 : index
    %0 = vector.load %arg1[%c0, %c0_0, %c0_1] : memref<8x1x32xf32, #tpu.memory_space<vmem>>, vector<8x1x32xf32>
    %c0_2 = arith.constant 0 : index
    %c0_3 = arith.constant 0 : index
    %c0_4 = arith.constant 0 : index
    %1 = vector.load %arg13[%c0_2, %c0_3, %c0_4] : memref<8x1x32xf32, #tpu.memory_space<vmem>>, vector<8x1x32xf32>
    tpu.vector_store %arg13[%c0_2, %c0_3, %c0_4], %0 {strides = array<i32>} : memref<8x1x32xf32, #tpu.memory_space<vmem>>, vector<8x1x32xf32>,
    %c0_5 = arith.constant 0 : index
    %c0_6 = arith.constant 0 : index
    %2 = vector.load %arg2[%c0_5, %c0_6] : memref<10x32xf32, #tpu.memory_space<vmem>>, vector<10x32xf32>
    %c0_7 = arith.constant 0 : index
    %c0_8 = arith.constant 0 : index
    %3 = vector.load %arg3[%c0_7, %c0_8] : memref<32x32xbf16, #tpu.memory_space<vmem>>, vector<32x32xbf16>
    %c0_9 = arith.constant 0 : index
    %c0_10 = arith.constant 0 : index
    %4 = vector.load %arg4[%c0_9, %c0_10] : memref<32x32xbf16, #tpu.memory_space<vmem>>, vector<32x32xbf16>
    %c0_11 = arith.constant 0 : index
    %c0_12 = arith.constant 0 : index
    %5 = vector.load %arg5[%c0_11, %c0_12] : memref<1x32xf32, #tpu.memory_space<vmem>>, vector<1x32xf32>
    %c0_13 = arith.constant 0 : index
    %c0_14 = arith.constant 0 : index
    %c0_15 = arith.constant 0 : index
    %6 = vector.load %arg8[%c0_13, %c0_14, %c0_15] : memref<8x1x96xf32, #tpu.memory_space<vmem>>, vector<8x1x96xf32>
    %c0_16 = arith.constant 0 : index
    %c0_17 = arith.constant 0 : index
    %c0_18 = arith.constant 0 : index
    %7 = vector.load %arg9[%c0_16, %c0_17, %c0_18] : memref<8x1x96xf32, #tpu.memory_space<vmem>>, vector<8x1x96xf32>
    %c0_i32 = arith.constant 0 : i32
    %c6_i32 = arith.constant 6 : i32
    %8 = arith.addi %c0_i32, %c6_i32 : i32
    %c1_i32 = arith.constant 1 : i32
    scf.for %arg16 = %c0_i32 to %8 step %c1_i32  : i32 {
      %c1_i32_30 = arith.constant 1 : i32
      %28 = arith.muli %arg16, %c1_i32_30 : i32
      %c0_i32_31 = arith.constant 0 : i32
      %29 = arith.addi %c0_i32_31, %28 : i32
      %c0_32 = arith.constant 0 : index
      %c0_33 = arith.constant 0 : index
      %c0_34 = arith.constant 0 : index
      %30 = vector.load %arg13[%c0_32, %c0_33, %c0_34] : memref<8x1x32xf32, #tpu.memory_space<vmem>>, vector<1x1x32xf32>
      %31 = vector.shape_cast %30 : vector<1x1x32xf32> to vector<1x32xf32>
      %cst_35 = arith.constant dense<0.000000e+00> : vector<1x10xf32>
      %32 = tpu.matmul %31, %2, %cst_35 {dimension_numbers = #tpu.dot_dimension_numbers<[1], [1], [0], [0], [0, 0, 1, 0], [], []>} : vector<1x32xf32>, vector<10x32xf32>, vector<1x10xf32> -> vector<1x10xf32>
      %cst_36 = arith.constant dense<0xFF800000> : vector<1xf32>
      %33 = vector.multi_reduction <maximumf>, %32, %cst_36 [1] : vector<1x10xf32> to vector<1xf32>
      %34 = vector.shape_cast %33 : vector<1xf32> to vector<1x1xf32>
      %35 = vector.broadcast %34 : vector<1x1xf32> to vector<1x10xf32>
      %36 = arith.subf %32, %35 : vector<1x10xf32>
      %37 = math.exp %36 : vector<1x10xf32>
      %cst_37 = arith.constant dense<0.000000e+00> : vector<1xf32>
      %38 = vector.multi_reduction <add>, %37, %cst_37 [1] : vector<1x10xf32> to vector<1xf32>
      %39 = vector.shape_cast %38 : vector<1xf32> to vector<1x1xf32>
      %40 = tpu.reciprocal %39 {approx = true} : vector<1x1xf32> -> vector<1x1xf32>
      %41 = vector.broadcast %40 : vector<1x1xf32> to vector<1x10xf32>
      %42 = arith.mulf %37, %41 : vector<1x10xf32>
      %43 = arith.index_cast %29 : i32 to index
      %c0_38 = arith.constant 0 : index
      %44 = vector.load %arg14[%43, %c0_38] : memref<6x10xf32, #tpu.memory_space<vmem>>, vector<1x10xf32>
      tpu.vector_store %arg14[%43, %c0_38], %42 {strides = array<i32>} : memref<6x10xf32, #tpu.memory_space<vmem>>, vector<1x10xf32>,
      %cst_39 = arith.constant dense<0.000000e+00> : vector<1x32xf32>
      %45 = tpu.matmul %42, %2, %cst_39 {dimension_numbers = #tpu.dot_dimension_numbers<[1], [0], [0], [1], [0, 0, 1, 1], [], []>} : vector<1x10xf32>, vector<10x32xf32>, vector<1x32xf32> -> vector<1x32xf32>
      %46 = arith.index_cast %29 : i32 to index
      %c0_40 = arith.constant 0 : index
      %47 = vector.load %arg0[%46, %c0_40] : memref<6x32xf32, #tpu.memory_space<vmem>>, vector<1x32xf32>
      %48 = arith.truncf %47 : vector<1x32xf32> to vector<1x32xbf16>
      %cst_41 = arith.constant dense<0.000000e+00> : vector<1x32xf32>
      %49 = tpu.matmul %48, %3, %cst_41 {dimension_numbers = #tpu.dot_dimension_numbers<[1], [0], [0], [1], [0, 0, 1, 1], [], []>} : vector<1x32xbf16>, vector<32x32xbf16>, vector<1x32xf32> -> vector<1x32xf32>
      %50 = arith.truncf %45 : vector<1x32xf32> to vector<1x32xbf16>
      %cst_42 = arith.constant dense<0.000000e+00> : vector<1x32xf32>
      %51 = tpu.matmul %50, %4, %cst_42 {dimension_numbers = #tpu.dot_dimension_numbers<[1], [0], [0], [1], [0, 0, 1, 1], [], []>} : vector<1x32xbf16>, vector<32x32xbf16>, vector<1x32xf32> -> vector<1x32xf32>
      %52 = arith.addf %49, %51 : vector<1x32xf32>
      %53 = arith.addf %52, %5 : vector<1x32xf32>
      %cst_43 = arith.constant 0.000000e+00 : f32
      %54 = vector.broadcast %cst_43 : f32 to vector<1x32xf32>
      %55 = arith.maximumf %53, %54 : vector<1x32xf32>
      %c0_44 = arith.constant 0 : index
      %c0_45 = arith.constant 0 : index
      %c0_46 = arith.constant 0 : index
      %56 = vector.load %arg13[%c0_44, %c0_45, %c0_46] : memref<8x1x32xf32, #tpu.memory_space<vmem>>, vector<1x1x32xf32>
      %57 = vector.shape_cast %56 : vector<1x1x32xf32> to vector<1x32xf32>
      %58 = arith.truncf %55 : vector<1x32xf32> to vector<1x32xbf16>
      %c0_47 = arith.constant 0 : index
      %c0_48 = arith.constant 0 : index
      %c0_49 = arith.constant 0 : index
      %59 = vector.load %arg6[%c0_47, %c0_48, %c0_49] : memref<8x32x96xbf16, #tpu.memory_space<vmem>>, vector<1x32x96xbf16>
      %60 = vector.shape_cast %59 : vector<1x32x96xbf16> to vector<32x96xbf16>
      %cst_50 = arith.constant dense<0.000000e+00> : vector<1x96xf32>
      %61 = tpu.matmul %58, %60, %cst_50 {dimension_numbers = #tpu.dot_dimension_numbers<[1], [0], [0], [1], [0, 0, 1, 1], [], []>} : vector<1x32xbf16>, vector<32x96xbf16>, vector<1x96xf32> -> vector<1x96xf32>
      %62 = vector.extract_strided_slice %6 {offsets = [0, 0, 0], sizes = [1, 1, 96], strides = [1, 1, 1]} : vector<8x1x96xf32> to vector<1x1x96xf32>
      %63 = vector.shape_cast %62 : vector<1x1x96xf32> to vector<1x96xf32>
      %64 = arith.addf %61, %63 : vector<1x96xf32>
      %65 = arith.truncf %57 : vector<1x32xf32> to vector<1x32xbf16>
      %c0_51 = arith.constant 0 : index
      %c0_52 = arith.constant 0 : index
      %c0_53 = arith.constant 0 : index
      %66 = vector.load %arg7[%c0_51, %c0_52, %c0_53] : memref<8x32x96xbf16, #tpu.memory_space<vmem>>, vector<1x32x96xbf16>
      %67 = vector.shape_cast %66 : vector<1x32x96xbf16> to vector<32x96xbf16>
      %cst_54 = arith.constant dense<0.000000e+00> : vector<1x96xf32>
      %68 = tpu.matmul %65, %67, %cst_54 {dimension_numbers = #tpu.dot_dimension_numbers<[1], [0], [0], [1], [0, 0, 1, 1], [], []>} : vector<1x32xbf16>, vector<32x96xbf16>, vector<1x96xf32> -> vector<1x96xf32>
      %69 = vector.extract_strided_slice %7 {offsets = [0, 0, 0], sizes = [1, 1, 96], strides = [1, 1, 1]} : vector<8x1x96xf32> to vector<1x1x96xf32>
      %70 = vector.shape_cast %69 : vector<1x1x96xf32> to vector<1x96xf32>
      %71 = arith.addf %68, %70 : vector<1x96xf32>
      %72 = vector.extract_strided_slice %64 {offsets = [0, 0], sizes = [1, 32], strides = [1, 1]} : vector<1x96xf32> to vector<1x32xf32>
      %73 = vector.extract_strided_slice %71 {offsets = [0, 0], sizes = [1, 32], strides = [1, 1]} : vector<1x96xf32> to vector<1x32xf32>
      %74 = arith.addf %72, %73 : vector<1x32xf32>
      %75 = arith.negf %74 : vector<1x32xf32>
      %76 = math.exp %75 : vector<1x32xf32>
      %cst_55 = arith.constant 1.000000e+00 : f32
      %77 = vector.broadcast %cst_55 : f32 to vector<1x32xf32>
      %78 = arith.addf %77, %76 : vector<1x32xf32>
      %79 = arith.divf %77, %78 : vector<1x32xf32>
      %80 = vector.extract_strided_slice %64 {offsets = [0, 32], sizes = [1, 32], strides = [1, 1]} : vector<1x96xf32> to vector<1x32xf32>
      %81 = vector.extract_strided_slice %71 {offsets = [0, 32], sizes = [1, 32], strides = [1, 1]} : vector<1x96xf32> to vector<1x32xf32>
      %82 = arith.addf %80, %81 : vector<1x32xf32>
      %83 = arith.negf %82 : vector<1x32xf32>
      %84 = math.exp %83 : vector<1x32xf32>
      %cst_56 = arith.constant 1.000000e+00 : f32
      %85 = vector.broadcast %cst_56 : f32 to vector<1x32xf32>
      %86 = arith.addf %85, %84 : vector<1x32xf32>
      %87 = arith.divf %85, %86 : vector<1x32xf32>
      %88 = vector.extract_strided_slice %64 {offsets = [0, 64], sizes = [1, 32], strides = [1, 1]} : vector<1x96xf32> to vector<1x32xf32>
      %89 = vector.extract_strided_slice %71 {offsets = [0, 64], sizes = [1, 32], strides = [1, 1]} : vector<1x96xf32> to vector<1x32xf32>
      %90 = arith.mulf %79, %89 : vector<1x32xf32>
      %91 = arith.addf %88, %90 : vector<1x32xf32>
      %92 = math.tanh %91 : vector<1x32xf32>
      %cst_57 = arith.constant 1.000000e+00 : f32
      %93 = vector.broadcast %cst_57 : f32 to vector<1x32xf32>
      %94 = arith.subf %93, %87 : vector<1x32xf32>
      %95 = arith.mulf %94, %92 : vector<1x32xf32>
      %96 = arith.mulf %87, %57 : vector<1x32xf32>
      %97 = arith.addf %95, %96 : vector<1x32xf32>
      %c0_58 = arith.constant 0 : index
      %c0_59 = arith.constant 0 : index
      %c0_60 = arith.constant 0 : index
      %98 = vector.load %arg13[%c0_58, %c0_59, %c0_60] : memref<8x1x32xf32, #tpu.memory_space<vmem>>, vector<1x1x32xf32>
      %99 = vector.shape_cast %98 : vector<1x1x32xf32> to vector<1x32xf32>
      %100 = vector.shape_cast %97 : vector<1x32xf32> to vector<1x1x32xf32>
      tpu.vector_store %arg13[%c0_58, %c0_59, %c0_60], %100 {strides = array<i32>} : memref<8x1x32xf32, #tpu.memory_space<vmem>>, vector<1x1x32xf32>,
      %c1 = arith.constant 1 : index
      %c0_61 = arith.constant 0 : index
      %c0_62 = arith.constant 0 : index
      %101 = vector.load %arg13[%c1, %c0_61, %c0_62] : memref<8x1x32xf32, #tpu.memory_space<vmem>>, vector<1x1x32xf32>
      %102 = vector.shape_cast %101 : vector<1x1x32xf32> to vector<1x32xf32>
      %103 = arith.truncf %97 : vector<1x32xf32> to vector<1x32xbf16>
      %c1_63 = arith.constant 1 : index
      %c0_64 = arith.constant 0 : index
      %c0_65 = arith.constant 0 : index
      %104 = vector.load %arg6[%c1_63, %c0_64, %c0_65] : memref<8x32x96xbf16, #tpu.memory_space<vmem>>, vector<1x32x96xbf16>
      %105 = vector.shape_cast %104 : vector<1x32x96xbf16> to vector<32x96xbf16>
      %cst_66 = arith.constant dense<0.000000e+00> : vector<1x96xf32>
      %106 = tpu.matmul %103, %105, %cst_66 {dimension_numbers = #tpu.dot_dimension_numbers<[1], [0], [0], [1], [0, 0, 1, 1], [], []>} : vector<1x32xbf16>, vector<32x96xbf16>, vector<1x96xf32> -> vector<1x96xf32>
      %107 = vector.extract_strided_slice %6 {offsets = [1, 0, 0], sizes = [1, 1, 96], strides = [1, 1, 1]} : vector<8x1x96xf32> to vector<1x1x96xf32>
      %108 = vector.shape_cast %107 : vector<1x1x96xf32> to vector<1x96xf32>
      %109 = arith.addf %106, %108 : vector<1x96xf32>
      %110 = arith.truncf %102 : vector<1x32xf32> to vector<1x32xbf16>
      %c1_67 = arith.constant 1 : index
      %c0_68 = arith.constant 0 : index
      %c0_69 = arith.constant 0 : index
      %111 = vector.load %arg7[%c1_67, %c0_68, %c0_69] : memref<8x32x96xbf16, #tpu.memory_space<vmem>>, vector<1x32x96xbf16>
      %112 = vector.shape_cast %111 : vector<1x32x96xbf16> to vector<32x96xbf16>
      %cst_70 = arith.constant dense<0.000000e+00> : vector<1x96xf32>
      %113 = tpu.matmul %110, %112, %cst_70 {dimension_numbers = #tpu.dot_dimension_numbers<[1], [0], [0], [1], [0, 0, 1, 1], [], []>} : vector<1x32xbf16>, vector<32x96xbf16>, vector<1x96xf32> -> vector<1x96xf32>
      %114 = vector.extract_strided_slice %7 {offsets = [1, 0, 0], sizes = [1, 1, 96], strides = [1, 1, 1]} : vector<8x1x96xf32> to vector<1x1x96xf32>
      %115 = vector.shape_cast %114 : vector<1x1x96xf32> to vector<1x96xf32>
      %116 = arith.addf %113, %115 : vector<1x96xf32>
      %117 = vector.extract_strided_slice %109 {offsets = [0, 0], sizes = [1, 32], strides = [1, 1]} : vector<1x96xf32> to vector<1x32xf32>
      %118 = vector.extract_strided_slice %116 {offsets = [0, 0], sizes = [1, 32], strides = [1, 1]} : vector<1x96xf32> to vector<1x32xf32>
      %119 = arith.addf %117, %118 : vector<1x32xf32>
      %120 = arith.negf %119 : vector<1x32xf32>
      %121 = math.exp %120 : vector<1x32xf32>
      %cst_71 = arith.constant 1.000000e+00 : f32
      %122 = vector.broadcast %cst_71 : f32 to vector<1x32xf32>
      %123 = arith.addf %122, %121 : vector<1x32xf32>
      %124 = arith.divf %122, %123 : vector<1x32xf32>
      %125 = vector.extract_strided_slice %109 {offsets = [0, 32], sizes = [1, 32], strides = [1, 1]} : vector<1x96xf32> to vector<1x32xf32>
      %126 = vector.extract_strided_slice %116 {offsets = [0, 32], sizes = [1, 32], strides = [1, 1]} : vector<1x96xf32> to vector<1x32xf32>
      %127 = arith.addf %125, %126 : vector<1x32xf32>
      %128 = arith.negf %127 : vector<1x32xf32>
      %129 = math.exp %128 : vector<1x32xf32>
      %cst_72 = arith.constant 1.000000e+00 : f32
      %130 = vector.broadcast %cst_72 : f32 to vector<1x32xf32>
      %131 = arith.addf %130, %129 : vector<1x32xf32>
      %132 = arith.divf %130, %131 : vector<1x32xf32>
      %133 = vector.extract_strided_slice %109 {offsets = [0, 64], sizes = [1, 32], strides = [1, 1]} : vector<1x96xf32> to vector<1x32xf32>
      %134 = vector.extract_strided_slice %116 {offsets = [0, 64], sizes = [1, 32], strides = [1, 1]} : vector<1x96xf32> to vector<1x32xf32>
      %135 = arith.mulf %124, %134 : vector<1x32xf32>
      %136 = arith.addf %133, %135 : vector<1x32xf32>
      %137 = math.tanh %136 : vector<1x32xf32>
      %cst_73 = arith.constant 1.000000e+00 : f32
      %138 = vector.broadcast %cst_73 : f32 to vector<1x32xf32>
      %139 = arith.subf %138, %132 : vector<1x32xf32>
      %140 = arith.mulf %139, %137 : vector<1x32xf32>
      %141 = arith.mulf %132, %102 : vector<1x32xf32>
      %142 = arith.addf %140, %141 : vector<1x32xf32>
      %c1_74 = arith.constant 1 : index
      %c0_75 = arith.constant 0 : index
      %c0_76 = arith.constant 0 : index
      %143 = vector.load %arg13[%c1_74, %c0_75, %c0_76] : memref<8x1x32xf32, #tpu.memory_space<vmem>>, vector<1x1x32xf32>
      %144 = vector.shape_cast %143 : vector<1x1x32xf32> to vector<1x32xf32>
      %145 = vector.shape_cast %142 : vector<1x32xf32> to vector<1x1x32xf32>
      tpu.vector_store %arg13[%c1_74, %c0_75, %c0_76], %145 {strides = array<i32>} : memref<8x1x32xf32, #tpu.memory_space<vmem>>, vector<1x1x32xf32>,
      %c2 = arith.constant 2 : index
      %c0_77 = arith.constant 0 : index
      %c0_78 = arith.constant 0 : index
      %146 = vector.load %arg13[%c2, %c0_77, %c0_78] : memref<8x1x32xf32, #tpu.memory_space<vmem>>, vector<1x1x32xf32>
      %147 = vector.shape_cast %146 : vector<1x1x32xf32> to vector<1x32xf32>
      %148 = arith.truncf %142 : vector<1x32xf32> to vector<1x32xbf16>
      %c2_79 = arith.constant 2 : index
      %c0_80 = arith.constant 0 : index
      %c0_81 = arith.constant 0 : index
      %149 = vector.load %arg6[%c2_79, %c0_80, %c0_81] : memref<8x32x96xbf16, #tpu.memory_space<vmem>>, vector<1x32x96xbf16>
      %150 = vector.shape_cast %149 : vector<1x32x96xbf16> to vector<32x96xbf16>
      %cst_82 = arith.constant dense<0.000000e+00> : vector<1x96xf32>
      %151 = tpu.matmul %148, %150, %cst_82 {dimension_numbers = #tpu.dot_dimension_numbers<[1], [0], [0], [1], [0, 0, 1, 1], [], []>} : vector<1x32xbf16>, vector<32x96xbf16>, vector<1x96xf32> -> vector<1x96xf32>
      %152 = vector.extract_strided_slice %6 {offsets = [2, 0, 0], sizes = [1, 1, 96], strides = [1, 1, 1]} : vector<8x1x96xf32> to vector<1x1x96xf32>
      %153 = vector.shape_cast %152 : vector<1x1x96xf32> to vector<1x96xf32>
      %154 = arith.addf %151, %153 : vector<1x96xf32>
      %155 = arith.truncf %147 : vector<1x32xf32> to vector<1x32xbf16>
      %c2_83 = arith.constant 2 : index
      %c0_84 = arith.constant 0 : index
      %c0_85 = arith.constant 0 : index
      %156 = vector.load %arg7[%c2_83, %c0_84, %c0_85] : memref<8x32x96xbf16, #tpu.memory_space<vmem>>, vector<1x32x96xbf16>
      %157 = vector.shape_cast %156 : vector<1x32x96xbf16> to vector<32x96xbf16>
      %cst_86 = arith.constant dense<0.000000e+00> : vector<1x96xf32>
      %158 = tpu.matmul %155, %157, %cst_86 {dimension_numbers = #tpu.dot_dimension_numbers<[1], [0], [0], [1], [0, 0, 1, 1], [], []>} : vector<1x32xbf16>, vector<32x96xbf16>, vector<1x96xf32> -> vector<1x96xf32>
      %159 = vector.extract_strided_slice %7 {offsets = [2, 0, 0], sizes = [1, 1, 96], strides = [1, 1, 1]} : vector<8x1x96xf32> to vector<1x1x96xf32>
      %160 = vector.shape_cast %159 : vector<1x1x96xf32> to vector<1x96xf32>
      %161 = arith.addf %158, %160 : vector<1x96xf32>
      %162 = vector.extract_strided_slice %154 {offsets = [0, 0], sizes = [1, 32], strides = [1, 1]} : vector<1x96xf32> to vector<1x32xf32>
      %163 = vector.extract_strided_slice %161 {offsets = [0, 0], sizes = [1, 32], strides = [1, 1]} : vector<1x96xf32> to vector<1x32xf32>
      %164 = arith.addf %162, %163 : vector<1x32xf32>
      %165 = arith.negf %164 : vector<1x32xf32>
      %166 = math.exp %165 : vector<1x32xf32>
      %cst_87 = arith.constant 1.000000e+00 : f32
      %167 = vector.broadcast %cst_87 : f32 to vector<1x32xf32>
      %168 = arith.addf %167, %166 : vector<1x32xf32>
      %169 = arith.divf %167, %168 : vector<1x32xf32>
      %170 = vector.extract_strided_slice %154 {offsets = [0, 32], sizes = [1, 32], strides = [1, 1]} : vector<1x96xf32> to vector<1x32xf32>
      %171 = vector.extract_strided_slice %161 {offsets = [0, 32], sizes = [1, 32], strides = [1, 1]} : vector<1x96xf32> to vector<1x32xf32>
      %172 = arith.addf %170, %171 : vector<1x32xf32>
      %173 = arith.negf %172 : vector<1x32xf32>
      %174 = math.exp %173 : vector<1x32xf32>
      %cst_88 = arith.constant 1.000000e+00 : f32
      %175 = vector.broadcast %cst_88 : f32 to vector<1x32xf32>
      %176 = arith.addf %175, %174 : vector<1x32xf32>
      %177 = arith.divf %175, %176 : vector<1x32xf32>
      %178 = vector.extract_strided_slice %154 {offsets = [0, 64], sizes = [1, 32], strides = [1, 1]} : vector<1x96xf32> to vector<1x32xf32>
      %179 = vector.extract_strided_slice %161 {offsets = [0, 64], sizes = [1, 32], strides = [1, 1]} : vector<1x96xf32> to vector<1x32xf32>
      %180 = arith.mulf %169, %179 : vector<1x32xf32>
      %181 = arith.addf %178, %180 : vector<1x32xf32>
      %182 = math.tanh %181 : vector<1x32xf32>
      %cst_89 = arith.constant 1.000000e+00 : f32
      %183 = vector.broadcast %cst_89 : f32 to vector<1x32xf32>
      %184 = arith.subf %183, %177 : vector<1x32xf32>
      %185 = arith.mulf %184, %182 : vector<1x32xf32>
      %186 = arith.mulf %177, %147 : vector<1x32xf32>
      %187 = arith.addf %185, %186 : vector<1x32xf32>
      %c2_90 = arith.constant 2 : index
      %c0_91 = arith.constant 0 : index
      %c0_92 = arith.constant 0 : index
      %188 = vector.load %arg13[%c2_90, %c0_91, %c0_92] : memref<8x1x32xf32, #tpu.memory_space<vmem>>, vector<1x1x32xf32>
      %189 = vector.shape_cast %188 : vector<1x1x32xf32> to vector<1x32xf32>
      %190 = vector.shape_cast %187 : vector<1x32xf32> to vector<1x1x32xf32>
      tpu.vector_store %arg13[%c2_90, %c0_91, %c0_92], %190 {strides = array<i32>} : memref<8x1x32xf32, #tpu.memory_space<vmem>>, vector<1x1x32xf32>,
      %c3 = arith.constant 3 : index
      %c0_93 = arith.constant 0 : index
      %c0_94 = arith.constant 0 : index
      %191 = vector.load %arg13[%c3, %c0_93, %c0_94] : memref<8x1x32xf32, #tpu.memory_space<vmem>>, vector<1x1x32xf32>
      %192 = vector.shape_cast %191 : vector<1x1x32xf32> to vector<1x32xf32>
      %193 = arith.truncf %187 : vector<1x32xf32> to vector<1x32xbf16>
      %c3_95 = arith.constant 3 : index
      %c0_96 = arith.constant 0 : index
      %c0_97 = arith.constant 0 : index
      %194 = vector.load %arg6[%c3_95, %c0_96, %c0_97] : memref<8x32x96xbf16, #tpu.memory_space<vmem>>, vector<1x32x96xbf16>
      %195 = vector.shape_cast %194 : vector<1x32x96xbf16> to vector<32x96xbf16>
      %cst_98 = arith.constant dense<0.000000e+00> : vector<1x96xf32>
      %196 = tpu.matmul %193, %195, %cst_98 {dimension_numbers = #tpu.dot_dimension_numbers<[1], [0], [0], [1], [0, 0, 1, 1], [], []>} : vector<1x32xbf16>, vector<32x96xbf16>, vector<1x96xf32> -> vector<1x96xf32>
      %197 = vector.extract_strided_slice %6 {offsets = [3, 0, 0], sizes = [1, 1, 96], strides = [1, 1, 1]} : vector<8x1x96xf32> to vector<1x1x96xf32>
      %198 = vector.shape_cast %197 : vector<1x1x96xf32> to vector<1x96xf32>
      %199 = arith.addf %196, %198 : vector<1x96xf32>
      %200 = arith.truncf %192 : vector<1x32xf32> to vector<1x32xbf16>
      %c3_99 = arith.constant 3 : index
      %c0_100 = arith.constant 0 : index
      %c0_101 = arith.constant 0 : index
      %201 = vector.load %arg7[%c3_99, %c0_100, %c0_101] : memref<8x32x96xbf16, #tpu.memory_space<vmem>>, vector<1x32x96xbf16>
      %202 = vector.shape_cast %201 : vector<1x32x96xbf16> to vector<32x96xbf16>
      %cst_102 = arith.constant dense<0.000000e+00> : vector<1x96xf32>
      %203 = tpu.matmul %200, %202, %cst_102 {dimension_numbers = #tpu.dot_dimension_numbers<[1], [0], [0], [1], [0, 0, 1, 1], [], []>} : vector<1x32xbf16>, vector<32x96xbf16>, vector<1x96xf32> -> vector<1x96xf32>
      %204 = vector.extract_strided_slice %7 {offsets = [3, 0, 0], sizes = [1, 1, 96], strides = [1, 1, 1]} : vector<8x1x96xf32> to vector<1x1x96xf32>
      %205 = vector.shape_cast %204 : vector<1x1x96xf32> to vector<1x96xf32>
      %206 = arith.addf %203, %205 : vector<1x96xf32>
      %207 = vector.extract_strided_slice %199 {offsets = [0, 0], sizes = [1, 32], strides = [1, 1]} : vector<1x96xf32> to vector<1x32xf32>
      %208 = vector.extract_strided_slice %206 {offsets = [0, 0], sizes = [1, 32], strides = [1, 1]} : vector<1x96xf32> to vector<1x32xf32>
      %209 = arith.addf %207, %208 : vector<1x32xf32>
      %210 = arith.negf %209 : vector<1x32xf32>
      %211 = math.exp %210 : vector<1x32xf32>
      %cst_103 = arith.constant 1.000000e+00 : f32
      %212 = vector.broadcast %cst_103 : f32 to vector<1x32xf32>
      %213 = arith.addf %212, %211 : vector<1x32xf32>
      %214 = arith.divf %212, %213 : vector<1x32xf32>
      %215 = vector.extract_strided_slice %199 {offsets = [0, 32], sizes = [1, 32], strides = [1, 1]} : vector<1x96xf32> to vector<1x32xf32>
      %216 = vector.extract_strided_slice %206 {offsets = [0, 32], sizes = [1, 32], strides = [1, 1]} : vector<1x96xf32> to vector<1x32xf32>
      %217 = arith.addf %215, %216 : vector<1x32xf32>
      %218 = arith.negf %217 : vector<1x32xf32>
      %219 = math.exp %218 : vector<1x32xf32>
      %cst_104 = arith.constant 1.000000e+00 : f32
      %220 = vector.broadcast %cst_104 : f32 to vector<1x32xf32>
      %221 = arith.addf %220, %219 : vector<1x32xf32>
      %222 = arith.divf %220, %221 : vector<1x32xf32>
      %223 = vector.extract_strided_slice %199 {offsets = [0, 64], sizes = [1, 32], strides = [1, 1]} : vector<1x96xf32> to vector<1x32xf32>
      %224 = vector.extract_strided_slice %206 {offsets = [0, 64], sizes = [1, 32], strides = [1, 1]} : vector<1x96xf32> to vector<1x32xf32>
      %225 = arith.mulf %214, %224 : vector<1x32xf32>
      %226 = arith.addf %223, %225 : vector<1x32xf32>
      %227 = math.tanh %226 : vector<1x32xf32>
      %cst_105 = arith.constant 1.000000e+00 : f32
      %228 = vector.broadcast %cst_105 : f32 to vector<1x32xf32>
      %229 = arith.subf %228, %222 : vector<1x32xf32>
      %230 = arith.mulf %229, %227 : vector<1x32xf32>
      %231 = arith.mulf %222, %192 : vector<1x32xf32>
      %232 = arith.addf %230, %231 : vector<1x32xf32>
      %c3_106 = arith.constant 3 : index
      %c0_107 = arith.constant 0 : index
      %c0_108 = arith.constant 0 : index
      %233 = vector.load %arg13[%c3_106, %c0_107, %c0_108] : memref<8x1x32xf32, #tpu.memory_space<vmem>>, vector<1x1x32xf32>
      %234 = vector.shape_cast %233 : vector<1x1x32xf32> to vector<1x32xf32>
      %235 = vector.shape_cast %232 : vector<1x32xf32> to vector<1x1x32xf32>
      tpu.vector_store %arg13[%c3_106, %c0_107, %c0_108], %235 {strides = array<i32>} : memref<8x1x32xf32, #tpu.memory_space<vmem>>, vector<1x1x32xf32>,
      %c4 = arith.constant 4 : index
      %c0_109 = arith.constant 0 : index
      %c0_110 = arith.constant 0 : index
      %236 = vector.load %arg13[%c4, %c0_109, %c0_110] : memref<8x1x32xf32, #tpu.memory_space<vmem>>, vector<1x1x32xf32>
      %237 = vector.shape_cast %236 : vector<1x1x32xf32> to vector<1x32xf32>
      %238 = arith.truncf %232 : vector<1x32xf32> to vector<1x32xbf16>
      %c4_111 = arith.constant 4 : index
      %c0_112 = arith.constant 0 : index
      %c0_113 = arith.constant 0 : index
      %239 = vector.load %arg6[%c4_111, %c0_112, %c0_113] : memref<8x32x96xbf16, #tpu.memory_space<vmem>>, vector<1x32x96xbf16>
      %240 = vector.shape_cast %239 : vector<1x32x96xbf16> to vector<32x96xbf16>
      %cst_114 = arith.constant dense<0.000000e+00> : vector<1x96xf32>
      %241 = tpu.matmul %238, %240, %cst_114 {dimension_numbers = #tpu.dot_dimension_numbers<[1], [0], [0], [1], [0, 0, 1, 1], [], []>} : vector<1x32xbf16>, vector<32x96xbf16>, vector<1x96xf32> -> vector<1x96xf32>
      %242 = vector.extract_strided_slice %6 {offsets = [4, 0, 0], sizes = [1, 1, 96], strides = [1, 1, 1]} : vector<8x1x96xf32> to vector<1x1x96xf32>
      %243 = vector.shape_cast %242 : vector<1x1x96xf32> to vector<1x96xf32>
      %244 = arith.addf %241, %243 : vector<1x96xf32>
      %245 = arith.truncf %237 : vector<1x32xf32> to vector<1x32xbf16>
      %c4_115 = arith.constant 4 : index
      %c0_116 = arith.constant 0 : index
      %c0_117 = arith.constant 0 : index
      %246 = vector.load %arg7[%c4_115, %c0_116, %c0_117] : memref<8x32x96xbf16, #tpu.memory_space<vmem>>, vector<1x32x96xbf16>
      %247 = vector.shape_cast %246 : vector<1x32x96xbf16> to vector<32x96xbf16>
      %cst_118 = arith.constant dense<0.000000e+00> : vector<1x96xf32>
      %248 = tpu.matmul %245, %247, %cst_118 {dimension_numbers = #tpu.dot_dimension_numbers<[1], [0], [0], [1], [0, 0, 1, 1], [], []>} : vector<1x32xbf16>, vector<32x96xbf16>, vector<1x96xf32> -> vector<1x96xf32>
      %249 = vector.extract_strided_slice %7 {offsets = [4, 0, 0], sizes = [1, 1, 96], strides = [1, 1, 1]} : vector<8x1x96xf32> to vector<1x1x96xf32>
      %250 = vector.shape_cast %249 : vector<1x1x96xf32> to vector<1x96xf32>
      %251 = arith.addf %248, %250 : vector<1x96xf32>
      %252 = vector.extract_strided_slice %244 {offsets = [0, 0], sizes = [1, 32], strides = [1, 1]} : vector<1x96xf32> to vector<1x32xf32>
      %253 = vector.extract_strided_slice %251 {offsets = [0, 0], sizes = [1, 32], strides = [1, 1]} : vector<1x96xf32> to vector<1x32xf32>
      %254 = arith.addf %252, %253 : vector<1x32xf32>
      %255 = arith.negf %254 : vector<1x32xf32>
      %256 = math.exp %255 : vector<1x32xf32>
      %cst_119 = arith.constant 1.000000e+00 : f32
      %257 = vector.broadcast %cst_119 : f32 to vector<1x32xf32>
      %258 = arith.addf %257, %256 : vector<1x32xf32>
      %259 = arith.divf %257, %258 : vector<1x32xf32>
      %260 = vector.extract_strided_slice %244 {offsets = [0, 32], sizes = [1, 32], strides = [1, 1]} : vector<1x96xf32> to vector<1x32xf32>
      %261 = vector.extract_strided_slice %251 {offsets = [0, 32], sizes = [1, 32], strides = [1, 1]} : vector<1x96xf32> to vector<1x32xf32>
      %262 = arith.addf %260, %261 : vector<1x32xf32>
      %263 = arith.negf %262 : vector<1x32xf32>
      %264 = math.exp %263 : vector<1x32xf32>
      %cst_120 = arith.constant 1.000000e+00 : f32
      %265 = vector.broadcast %cst_120 : f32 to vector<1x32xf32>
      %266 = arith.addf %265, %264 : vector<1x32xf32>
      %267 = arith.divf %265, %266 : vector<1x32xf32>
      %268 = vector.extract_strided_slice %244 {offsets = [0, 64], sizes = [1, 32], strides = [1, 1]} : vector<1x96xf32> to vector<1x32xf32>
      %269 = vector.extract_strided_slice %251 {offsets = [0, 64], sizes = [1, 32], strides = [1, 1]} : vector<1x96xf32> to vector<1x32xf32>
      %270 = arith.mulf %259, %269 : vector<1x32xf32>
      %271 = arith.addf %268, %270 : vector<1x32xf32>
      %272 = math.tanh %271 : vector<1x32xf32>
      %cst_121 = arith.constant 1.000000e+00 : f32
      %273 = vector.broadcast %cst_121 : f32 to vector<1x32xf32>
      %274 = arith.subf %273, %267 : vector<1x32xf32>
      %275 = arith.mulf %274, %272 : vector<1x32xf32>
      %276 = arith.mulf %267, %237 : vector<1x32xf32>
      %277 = arith.addf %275, %276 : vector<1x32xf32>
      %c4_122 = arith.constant 4 : index
      %c0_123 = arith.constant 0 : index
      %c0_124 = arith.constant 0 : index
      %278 = vector.load %arg13[%c4_122, %c0_123, %c0_124] : memref<8x1x32xf32, #tpu.memory_space<vmem>>, vector<1x1x32xf32>
      %279 = vector.shape_cast %278 : vector<1x1x32xf32> to vector<1x32xf32>
      %280 = vector.shape_cast %277 : vector<1x32xf32> to vector<1x1x32xf32>
      tpu.vector_store %arg13[%c4_122, %c0_123, %c0_124], %280 {strides = array<i32>} : memref<8x1x32xf32, #tpu.memory_space<vmem>>, vector<1x1x32xf32>,
      %c5 = arith.constant 5 : index
      %c0_125 = arith.constant 0 : index
      %c0_126 = arith.constant 0 : index
      %281 = vector.load %arg13[%c5, %c0_125, %c0_126] : memref<8x1x32xf32, #tpu.memory_space<vmem>>, vector<1x1x32xf32>
      %282 = vector.shape_cast %281 : vector<1x1x32xf32> to vector<1x32xf32>
      %283 = arith.truncf %277 : vector<1x32xf32> to vector<1x32xbf16>
      %c5_127 = arith.constant 5 : index
      %c0_128 = arith.constant 0 : index
      %c0_129 = arith.constant 0 : index
      %284 = vector.load %arg6[%c5_127, %c0_128, %c0_129] : memref<8x32x96xbf16, #tpu.memory_space<vmem>>, vector<1x32x96xbf16>
      %285 = vector.shape_cast %284 : vector<1x32x96xbf16> to vector<32x96xbf16>
      %cst_130 = arith.constant dense<0.000000e+00> : vector<1x96xf32>
      %286 = tpu.matmul %283, %285, %cst_130 {dimension_numbers = #tpu.dot_dimension_numbers<[1], [0], [0], [1], [0, 0, 1, 1], [], []>} : vector<1x32xbf16>, vector<32x96xbf16>, vector<1x96xf32> -> vector<1x96xf32>
      %287 = vector.extract_strided_slice %6 {offsets = [5, 0, 0], sizes = [1, 1, 96], strides = [1, 1, 1]} : vector<8x1x96xf32> to vector<1x1x96xf32>
      %288 = vector.shape_cast %287 : vector<1x1x96xf32> to vector<1x96xf32>
      %289 = arith.addf %286, %288 : vector<1x96xf32>
      %290 = arith.truncf %282 : vector<1x32xf32> to vector<1x32xbf16>
      %c5_131 = arith.constant 5 : index
      %c0_132 = arith.constant 0 : index
      %c0_133 = arith.constant 0 : index
      %291 = vector.load %arg7[%c5_131, %c0_132, %c0_133] : memref<8x32x96xbf16, #tpu.memory_space<vmem>>, vector<1x32x96xbf16>
      %292 = vector.shape_cast %291 : vector<1x32x96xbf16> to vector<32x96xbf16>
      %cst_134 = arith.constant dense<0.000000e+00> : vector<1x96xf32>
      %293 = tpu.matmul %290, %292, %cst_134 {dimension_numbers = #tpu.dot_dimension_numbers<[1], [0], [0], [1], [0, 0, 1, 1], [], []>} : vector<1x32xbf16>, vector<32x96xbf16>, vector<1x96xf32> -> vector<1x96xf32>
      %294 = vector.extract_strided_slice %7 {offsets = [5, 0, 0], sizes = [1, 1, 96], strides = [1, 1, 1]} : vector<8x1x96xf32> to vector<1x1x96xf32>
      %295 = vector.shape_cast %294 : vector<1x1x96xf32> to vector<1x96xf32>
      %296 = arith.addf %293, %295 : vector<1x96xf32>
      %297 = vector.extract_strided_slice %289 {offsets = [0, 0], sizes = [1, 32], strides = [1, 1]} : vector<1x96xf32> to vector<1x32xf32>
      %298 = vector.extract_strided_slice %296 {offsets = [0, 0], sizes = [1, 32], strides = [1, 1]} : vector<1x96xf32> to vector<1x32xf32>
      %299 = arith.addf %297, %298 : vector<1x32xf32>
      %300 = arith.negf %299 : vector<1x32xf32>
      %301 = math.exp %300 : vector<1x32xf32>
      %cst_135 = arith.constant 1.000000e+00 : f32
      %302 = vector.broadcast %cst_135 : f32 to vector<1x32xf32>
      %303 = arith.addf %302, %301 : vector<1x32xf32>
      %304 = arith.divf %302, %303 : vector<1x32xf32>
      %305 = vector.extract_strided_slice %289 {offsets = [0, 32], sizes = [1, 32], strides = [1, 1]} : vector<1x96xf32> to vector<1x32xf32>
      %306 = vector.extract_strided_slice %296 {offsets = [0, 32], sizes = [1, 32], strides = [1, 1]} : vector<1x96xf32> to vector<1x32xf32>
      %307 = arith.addf %305, %306 : vector<1x32xf32>
      %308 = arith.negf %307 : vector<1x32xf32>
      %309 = math.exp %308 : vector<1x32xf32>
      %cst_136 = arith.constant 1.000000e+00 : f32
      %310 = vector.broadcast %cst_136 : f32 to vector<1x32xf32>
      %311 = arith.addf %310, %309 : vector<1x32xf32>
      %312 = arith.divf %310, %311 : vector<1x32xf32>
      %313 = vector.extract_strided_slice %289 {offsets = [0, 64], sizes = [1, 32], strides = [1, 1]} : vector<1x96xf32> to vector<1x32xf32>
      %314 = vector.extract_strided_slice %296 {offsets = [0, 64], sizes = [1, 32], strides = [1, 1]} : vector<1x96xf32> to vector<1x32xf32>
      %315 = arith.mulf %304, %314 : vector<1x32xf32>
      %316 = arith.addf %313, %315 : vector<1x32xf32>
      %317 = math.tanh %316 : vector<1x32xf32>
      %cst_137 = arith.constant 1.000000e+00 : f32
      %318 = vector.broadcast %cst_137 : f32 to vector<1x32xf32>
      %319 = arith.subf %318, %312 : vector<1x32xf32>
      %320 = arith.mulf %319, %317 : vector<1x32xf32>
      %321 = arith.mulf %312, %282 : vector<1x32xf32>
      %322 = arith.addf %320, %321 : vector<1x32xf32>
      %c5_138 = arith.constant 5 : index
      %c0_139 = arith.constant 0 : index
      %c0_140 = arith.constant 0 : index
      %323 = vector.load %arg13[%c5_138, %c0_139, %c0_140] : memref<8x1x32xf32, #tpu.memory_space<vmem>>, vector<1x1x32xf32>
      %324 = vector.shape_cast %323 : vector<1x1x32xf32> to vector<1x32xf32>
      %325 = vector.shape_cast %322 : vector<1x32xf32> to vector<1x1x32xf32>
      tpu.vector_store %arg13[%c5_138, %c0_139, %c0_140], %325 {strides = array<i32>} : memref<8x1x32xf32, #tpu.memory_space<vmem>>, vector<1x1x32xf32>,
      %c6 = arith.constant 6 : index
      %c0_141 = arith.constant 0 : index
      %c0_142 = arith.constant 0 : index
      %326 = vector.load %arg13[%c6, %c0_141, %c0_142] : memref<8x1x32xf32, #tpu.memory_space<vmem>>, vector<1x1x32xf32>
      %327 = vector.shape_cast %326 : vector<1x1x32xf32> to vector<1x32xf32>
      %328 = arith.truncf %322 : vector<1x32xf32> to vector<1x32xbf16>
      %c6_143 = arith.constant 6 : index
      %c0_144 = arith.constant 0 : index
      %c0_145 = arith.constant 0 : index
      %329 = vector.load %arg6[%c6_143, %c0_144, %c0_145] : memref<8x32x96xbf16, #tpu.memory_space<vmem>>, vector<1x32x96xbf16>
      %330 = vector.shape_cast %329 : vector<1x32x96xbf16> to vector<32x96xbf16>
      %cst_146 = arith.constant dense<0.000000e+00> : vector<1x96xf32>
      %331 = tpu.matmul %328, %330, %cst_146 {dimension_numbers = #tpu.dot_dimension_numbers<[1], [0], [0], [1], [0, 0, 1, 1], [], []>} : vector<1x32xbf16>, vector<32x96xbf16>, vector<1x96xf32> -> vector<1x96xf32>
      %332 = vector.extract_strided_slice %6 {offsets = [6, 0, 0], sizes = [1, 1, 96], strides = [1, 1, 1]} : vector<8x1x96xf32> to vector<1x1x96xf32>
      %333 = vector.shape_cast %332 : vector<1x1x96xf32> to vector<1x96xf32>
      %334 = arith.addf %331, %333 : vector<1x96xf32>
      %335 = arith.truncf %327 : vector<1x32xf32> to vector<1x32xbf16>
      %c6_147 = arith.constant 6 : index
      %c0_148 = arith.constant 0 : index
      %c0_149 = arith.constant 0 : index
      %336 = vector.load %arg7[%c6_147, %c0_148, %c0_149] : memref<8x32x96xbf16, #tpu.memory_space<vmem>>, vector<1x32x96xbf16>
      %337 = vector.shape_cast %336 : vector<1x32x96xbf16> to vector<32x96xbf16>
      %cst_150 = arith.constant dense<0.000000e+00> : vector<1x96xf32>
      %338 = tpu.matmul %335, %337, %cst_150 {dimension_numbers = #tpu.dot_dimension_numbers<[1], [0], [0], [1], [0, 0, 1, 1], [], []>} : vector<1x32xbf16>, vector<32x96xbf16>, vector<1x96xf32> -> vector<1x96xf32>
      %339 = vector.extract_strided_slice %7 {offsets = [6, 0, 0], sizes = [1, 1, 96], strides = [1, 1, 1]} : vector<8x1x96xf32> to vector<1x1x96xf32>
      %340 = vector.shape_cast %339 : vector<1x1x96xf32> to vector<1x96xf32>
      %341 = arith.addf %338, %340 : vector<1x96xf32>
      %342 = vector.extract_strided_slice %334 {offsets = [0, 0], sizes = [1, 32], strides = [1, 1]} : vector<1x96xf32> to vector<1x32xf32>
      %343 = vector.extract_strided_slice %341 {offsets = [0, 0], sizes = [1, 32], strides = [1, 1]} : vector<1x96xf32> to vector<1x32xf32>
      %344 = arith.addf %342, %343 : vector<1x32xf32>
      %345 = arith.negf %344 : vector<1x32xf32>
      %346 = math.exp %345 : vector<1x32xf32>
      %cst_151 = arith.constant 1.000000e+00 : f32
      %347 = vector.broadcast %cst_151 : f32 to vector<1x32xf32>
      %348 = arith.addf %347, %346 : vector<1x32xf32>
      %349 = arith.divf %347, %348 : vector<1x32xf32>
      %350 = vector.extract_strided_slice %334 {offsets = [0, 32], sizes = [1, 32], strides = [1, 1]} : vector<1x96xf32> to vector<1x32xf32>
      %351 = vector.extract_strided_slice %341 {offsets = [0, 32], sizes = [1, 32], strides = [1, 1]} : vector<1x96xf32> to vector<1x32xf32>
      %352 = arith.addf %350, %351 : vector<1x32xf32>
      %353 = arith.negf %352 : vector<1x32xf32>
      %354 = math.exp %353 : vector<1x32xf32>
      %cst_152 = arith.constant 1.000000e+00 : f32
      %355 = vector.broadcast %cst_152 : f32 to vector<1x32xf32>
      %356 = arith.addf %355, %354 : vector<1x32xf32>
      %357 = arith.divf %355, %356 : vector<1x32xf32>
      %358 = vector.extract_strided_slice %334 {offsets = [0, 64], sizes = [1, 32], strides = [1, 1]} : vector<1x96xf32> to vector<1x32xf32>
      %359 = vector.extract_strided_slice %341 {offsets = [0, 64], sizes = [1, 32], strides = [1, 1]} : vector<1x96xf32> to vector<1x32xf32>
      %360 = arith.mulf %349, %359 : vector<1x32xf32>
      %361 = arith.addf %358, %360 : vector<1x32xf32>
      %362 = math.tanh %361 : vector<1x32xf32>
      %cst_153 = arith.constant 1.000000e+00 : f32
      %363 = vector.broadcast %cst_153 : f32 to vector<1x32xf32>
      %364 = arith.subf %363, %357 : vector<1x32xf32>
      %365 = arith.mulf %364, %362 : vector<1x32xf32>
      %366 = arith.mulf %357, %327 : vector<1x32xf32>
      %367 = arith.addf %365, %366 : vector<1x32xf32>
      %c6_154 = arith.constant 6 : index
      %c0_155 = arith.constant 0 : index
      %c0_156 = arith.constant 0 : index
      %368 = vector.load %arg13[%c6_154, %c0_155, %c0_156] : memref<8x1x32xf32, #tpu.memory_space<vmem>>, vector<1x1x32xf32>
      %369 = vector.shape_cast %368 : vector<1x1x32xf32> to vector<1x32xf32>
      %370 = vector.shape_cast %367 : vector<1x32xf32> to vector<1x1x32xf32>
      tpu.vector_store %arg13[%c6_154, %c0_155, %c0_156], %370 {strides = array<i32>} : memref<8x1x32xf32, #tpu.memory_space<vmem>>, vector<1x1x32xf32>,
      %c7 = arith.constant 7 : index
      %c0_157 = arith.constant 0 : index
      %c0_158 = arith.constant 0 : index
      %371 = vector.load %arg13[%c7, %c0_157, %c0_158] : memref<8x1x32xf32, #tpu.memory_space<vmem>>, vector<1x1x32xf32>
      %372 = vector.shape_cast %371 : vector<1x1x32xf32> to vector<1x32xf32>
      %373 = arith.truncf %367 : vector<1x32xf32> to vector<1x32xbf16>
      %c7_159 = arith.constant 7 : index
      %c0_160 = arith.constant 0 : index
      %c0_161 = arith.constant 0 : index
      %374 = vector.load %arg6[%c7_159, %c0_160, %c0_161] : memref<8x32x96xbf16, #tpu.memory_space<vmem>>, vector<1x32x96xbf16>
      %375 = vector.shape_cast %374 : vector<1x32x96xbf16> to vector<32x96xbf16>
      %cst_162 = arith.constant dense<0.000000e+00> : vector<1x96xf32>
      %376 = tpu.matmul %373, %375, %cst_162 {dimension_numbers = #tpu.dot_dimension_numbers<[1], [0], [0], [1], [0, 0, 1, 1], [], []>} : vector<1x32xbf16>, vector<32x96xbf16>, vector<1x96xf32> -> vector<1x96xf32>
      %377 = vector.extract_strided_slice %6 {offsets = [7, 0, 0], sizes = [1, 1, 96], strides = [1, 1, 1]} : vector<8x1x96xf32> to vector<1x1x96xf32>
      %378 = vector.shape_cast %377 : vector<1x1x96xf32> to vector<1x96xf32>
      %379 = arith.addf %376, %378 : vector<1x96xf32>
      %380 = arith.truncf %372 : vector<1x32xf32> to vector<1x32xbf16>
      %c7_163 = arith.constant 7 : index
      %c0_164 = arith.constant 0 : index
      %c0_165 = arith.constant 0 : index
      %381 = vector.load %arg7[%c7_163, %c0_164, %c0_165] : memref<8x32x96xbf16, #tpu.memory_space<vmem>>, vector<1x32x96xbf16>
      %382 = vector.shape_cast %381 : vector<1x32x96xbf16> to vector<32x96xbf16>
      %cst_166 = arith.constant dense<0.000000e+00> : vector<1x96xf32>
      %383 = tpu.matmul %380, %382, %cst_166 {dimension_numbers = #tpu.dot_dimension_numbers<[1], [0], [0], [1], [0, 0, 1, 1], [], []>} : vector<1x32xbf16>, vector<32x96xbf16>, vector<1x96xf32> -> vector<1x96xf32>
      %384 = vector.extract_strided_slice %7 {offsets = [7, 0, 0], sizes = [1, 1, 96], strides = [1, 1, 1]} : vector<8x1x96xf32> to vector<1x1x96xf32>
      %385 = vector.shape_cast %384 : vector<1x1x96xf32> to vector<1x96xf32>
      %386 = arith.addf %383, %385 : vector<1x96xf32>
      %387 = vector.extract_strided_slice %379 {offsets = [0, 0], sizes = [1, 32], strides = [1, 1]} : vector<1x96xf32> to vector<1x32xf32>
      %388 = vector.extract_strided_slice %386 {offsets = [0, 0], sizes = [1, 32], strides = [1, 1]} : vector<1x96xf32> to vector<1x32xf32>
      %389 = arith.addf %387, %388 : vector<1x32xf32>
      %390 = arith.negf %389 : vector<1x32xf32>
      %391 = math.exp %390 : vector<1x32xf32>
      %cst_167 = arith.constant 1.000000e+00 : f32
      %392 = vector.broadcast %cst_167 : f32 to vector<1x32xf32>
      %393 = arith.addf %392, %391 : vector<1x32xf32>
      %394 = arith.divf %392, %393 : vector<1x32xf32>
      %395 = vector.extract_strided_slice %379 {offsets = [0, 32], sizes = [1, 32], strides = [1, 1]} : vector<1x96xf32> to vector<1x32xf32>
      %396 = vector.extract_strided_slice %386 {offsets = [0, 32], sizes = [1, 32], strides = [1, 1]} : vector<1x96xf32> to vector<1x32xf32>
      %397 = arith.addf %395, %396 : vector<1x32xf32>
      %398 = arith.negf %397 : vector<1x32xf32>
      %399 = math.exp %398 : vector<1x32xf32>
      %cst_168 = arith.constant 1.000000e+00 : f32
      %400 = vector.broadcast %cst_168 : f32 to vector<1x32xf32>
      %401 = arith.addf %400, %399 : vector<1x32xf32>
      %402 = arith.divf %400, %401 : vector<1x32xf32>
      %403 = vector.extract_strided_slice %379 {offsets = [0, 64], sizes = [1, 32], strides = [1, 1]} : vector<1x96xf32> to vector<1x32xf32>
      %404 = vector.extract_strided_slice %386 {offsets = [0, 64], sizes = [1, 32], strides = [1, 1]} : vector<1x96xf32> to vector<1x32xf32>
      %405 = arith.mulf %394, %404 : vector<1x32xf32>
      %406 = arith.addf %403, %405 : vector<1x32xf32>
      %407 = math.tanh %406 : vector<1x32xf32>
      %cst_169 = arith.constant 1.000000e+00 : f32
      %408 = vector.broadcast %cst_169 : f32 to vector<1x32xf32>
      %409 = arith.subf %408, %402 : vector<1x32xf32>
      %410 = arith.mulf %409, %407 : vector<1x32xf32>
      %411 = arith.mulf %402, %372 : vector<1x32xf32>
      %412 = arith.addf %410, %411 : vector<1x32xf32>
      %c7_170 = arith.constant 7 : index
      %c0_171 = arith.constant 0 : index
      %c0_172 = arith.constant 0 : index
      %413 = vector.load %arg13[%c7_170, %c0_171, %c0_172] : memref<8x1x32xf32, #tpu.memory_space<vmem>>, vector<1x1x32xf32>
      %414 = vector.shape_cast %413 : vector<1x1x32xf32> to vector<1x32xf32>
      %415 = vector.shape_cast %412 : vector<1x32xf32> to vector<1x1x32xf32>
      tpu.vector_store %arg13[%c7_170, %c0_171, %c0_172], %415 {strides = array<i32>} : memref<8x1x32xf32, #tpu.memory_space<vmem>>, vector<1x1x32xf32>,
      %416 = arith.index_cast %29 : i32 to index
      %c0_173 = arith.constant 0 : index
      %417 = vector.load %arg15[%416, %c0_173] : memref<6x32xf32, #tpu.memory_space<vmem>>, vector<1x32xf32>
      tpu.vector_store %arg15[%416, %c0_173], %412 {strides = array<i32>} : memref<6x32xf32, #tpu.memory_space<vmem>>, vector<1x32xf32>,
    }
    %c6_i32_19 = arith.constant 6 : i32
    %c0_20 = arith.constant 0 : index
    %c0_21 = arith.constant 0 : index
    %9 = vector.load %arg15[%c0_20, %c0_21] : memref<6x32xf32, #tpu.memory_space<vmem>>, vector<6x32xf32>
    %10 = arith.truncf %9 : vector<6x32xf32> to vector<6x32xbf16>
    %c0_22 = arith.constant 0 : index
    %c0_23 = arith.constant 0 : index
    %11 = vector.load %arg10[%c0_22, %c0_23] : memref<32x16xbf16, #tpu.memory_space<vmem>>, vector<32x16xbf16>
    %cst = arith.constant dense<0.000000e+00> : vector<6x16xf32>
    %12 = tpu.matmul %10, %11, %cst {dimension_numbers = #tpu.dot_dimension_numbers<[1], [0], [0], [1], [0, 0, 1, 1], [], []>} : vector<6x32xbf16>, vector<32x16xbf16>, vector<6x16xf32> -> vector<6x16xf32>
    %c0_24 = arith.constant 0 : index
    %c0_25 = arith.constant 0 : index
    %13 = vector.load %arg11[%c0_24, %c0_25] : memref<1x16xf32, #tpu.memory_space<vmem>>, vector<1x16xf32>
    %14 = vector.broadcast %13 : vector<1x16xf32> to vector<6x16xf32>
    %15 = arith.addf %12, %14 : vector<6x16xf32>
    %cst_26 = arith.constant dense<0xFF800000> : vector<6xf32>
    %16 = vector.multi_reduction <maximumf>, %15, %cst_26 [1] : vector<6x16xf32> to vector<6xf32>
    %17 = vector.shape_cast %16 : vector<6xf32> to vector<6x1xf32>
    %18 = vector.broadcast %17 : vector<6x1xf32> to vector<6x16xf32>
    %19 = arith.subf %15, %18 : vector<6x16xf32>
    %20 = math.exp %19 : vector<6x16xf32>
    %cst_27 = arith.constant dense<0.000000e+00> : vector<6xf32>
    %21 = vector.multi_reduction <add>, %20, %cst_27 [1] : vector<6x16xf32> to vector<6xf32>
    %22 = vector.shape_cast %21 : vector<6xf32> to vector<6x1xf32>
    %23 = math.log %22 : vector<6x1xf32>
    %24 = arith.addf %17, %23 : vector<6x1xf32>
    %25 = vector.broadcast %24 : vector<6x1xf32> to vector<6x16xf32>
    %26 = arith.subf %15, %25 : vector<6x16xf32>
    %c0_28 = arith.constant 0 : index
    %c0_29 = arith.constant 0 : index
    %27 = vector.load %arg12[%c0_28, %c0_29] : memref<6x16xf32, #tpu.memory_space<vmem>>, vector<6x16xf32>
    tpu.vector_store %arg12[%c0_28, %c0_29], %26 {strides = array<i32>} : memref<6x16xf32, #tpu.memory_space<vmem>>, vector<6x16xf32>,
    return
  }
}

</mosaic_0001>

<llo_original>
// kernel: tpu_custom_call.1
$region0: #{tpu_custom_call.1}
  #allocation0 [shape = 'u32[]', space=smem, size = 0x4, offset = 0x4, fixed_abs, tag = 'smem constant byte address 0x4 - core index']
  #allocation1 [shape = 'u32[72,128]{1,0:T(1,128)}', space=vmem, size = 0x9000, scoped, tag = 'internal scratch']
  #allocation2 [shape = 'f32[6,32]{1,0:T(8,128)}', space=vmem, size = 0x1000, scoped, tag = 'scratch operand']
  %s0 = inlined_call_operand.vmem [shape: f32[6,32], index: 0, kind: input, shape index: {}]
  %s1 = inlined_call_operand.hbm [shape: f32[8,1,32], index: 1, kind: input, shape index: {}]
  %s2 = inlined_call_operand.vmem [shape: f32[10,32], index: 2, kind: input, shape index: {}]
  %s3 = inlined_call_operand.hbm [shape: bf16[32,32], index: 3, kind: input, shape index: {}]
  %s4 = inlined_call_operand.hbm [shape: bf16[32,32], index: 4, kind: input, shape index: {}]
  %s5 = inlined_call_operand.vmem [shape: f32[1,32], index: 5, kind: input, shape index: {}]
  %s6 = inlined_call_operand.hbm [shape: bf16[8,32,96], index: 6, kind: input, shape index: {}]
  %s7 = inlined_call_operand.hbm [shape: bf16[8,32,96], index: 7, kind: input, shape index: {}]
  %s8 = inlined_call_operand.hbm [shape: f32[8,1,96], index: 8, kind: input, shape index: {}]
  %s9 = inlined_call_operand.hbm [shape: f32[8,1,96], index: 9, kind: input, shape index: {}]
  %s10 = inlined_call_operand.vmem [shape: bf16[32,16], index: 10, kind: input, shape index: {}]
  %s11 = inlined_call_operand.vmem [shape: f32[1,16], index: 11, kind: input, shape index: {}]
  %s12 = inlined_call_operand.hbm [shape: f32[6,16], index: 12, kind: output, shape index: {0}]
  %s13 = inlined_call_operand.hbm [shape: f32[8,1,32], index: 13, kind: output, shape index: {1}]
  %s14 = inlined_call_operand.hbm [shape: f32[6,10], index: 14, kind: output, shape index: {2}]
  %15 = xla_tuple %s12, %s13, %s14
  %s16 = sld [smem:[#allocation0]]
  $region109: #{tpu_custom_call.1} parent=0
    _
  %s18 = ssub.s32 1, %s16
  %s19 = scalar_select 0, %s18, %s16
  $region1: #{tpu_custom_call.1} parent=0
    #allocation3 [shape = 'u8[4096]{0}', space=vmem, size = 0x1000, scoped, tag = 'input window, operand 1, single buffered']
    #allocation4 [shape = 's32[1]{0}', space=sflag, size = 0x4, scoped, tag = 'scoped memory for tpu_custom_call.1']
    #allocation5 [shape = 's32[1]{0}', space=sflag, size = 0x4, scoped, tag = 'scoped memory for tpu_custom_call.1']
    #allocation6 [shape = 'u8[8192]{0}', space=vmem, size = 0x2000, scoped, tag = 'input window, operand 3, single buffered']
    #allocation7 [shape = 's32[1]{0}', space=sflag, size = 0x4, scoped, tag = 'scoped memory for tpu_custom_call.1']
    #allocation8 [shape = 'u8[8192]{0}', space=vmem, size = 0x2000, scoped, tag = 'input window, operand 4, single buffered']
    #allocation9 [shape = 'u8[65536]{0}', space=vmem, size = 0x10000, scoped, tag = 'input window, operand 6, single buffered']
    #allocation10 [shape = 's32[1]{0}', space=sflag, size = 0x4, scoped, tag = 'scoped memory for tpu_custom_call.1']
    #allocation11 [shape = 'u8[65536]{0}', space=vmem, size = 0x10000, scoped, tag = 'input window, operand 7, single buffered']
    #allocation12 [shape = 'u8[4096]{0}', space=vmem, size = 0x1000, scoped, tag = 'input window, operand 8, single buffered']
    #allocation13 [shape = 's32[1]{0}', space=sflag, size = 0x4, scoped, tag = 'scoped memory for tpu_custom_call.1']
    #allocation14 [shape = 'u8[4096]{0}', space=vmem, size = 0x1000, scoped, tag = 'input window, operand 9, single buffered']
    #allocation15 [shape = 'u8[4096]{0}', space=vmem, size = 0x1000, scoped, tag = 'output window, operand 0, single buffered']
    #allocation16 [shape = 'u8[4096]{0}', space=vmem, size = 0x1000, scoped, tag = 'output window, operand 1, single buffered']
    #allocation17 [shape = 's32[1]{0}', space=sflag, size = 0x4, scoped, tag = 'scoped memory for tpu_custom_call.1']
    #allocation18 [shape = 'u8[4096]{0}', space=vmem, size = 0x1000, scoped, tag = 'output window, operand 2, single buffered']
    %20 = vsyncpa [#allocation4], 0
    %21 = vsyncpa [#allocation7], 0
    %22 = vsyncpa [#allocation10], 0
    %23 = vsyncpa [#allocation13], 0
    %24 = vsyncpa [#allocation5], 0
    %25 = vsyncpa [#allocation17], 0
    // Predicated region
    $region2: #{tpu_custom_call.1} parent=1 // pred_check
      _
    $region3: #{tpu_custom_call.1} parent=1 // pred_check_branch
      %27 = sbr.rel (0) target = $region5
    $region4: #{tpu_custom_call.1} parent=1 // pred_region
      _
    $region5: #{tpu_custom_call.1} parent=1 // pred_fallthru
      _
    // Predicated region
    $region6: #{tpu_custom_call.1} parent=1 // pred_check
      _
    $region7: #{tpu_custom_call.1} parent=1 // pred_check_branch
      %29 = sbr.rel (0) target = $region9
    $region8: #{tpu_custom_call.1} parent=1 // pred_region
      %31 = vsyncadd [#allocation4], 0
      %s32 = sshll.u32 %s1, 4
      %s33 = int_to_ptr.hbm [resolvable:$true] %s32
      %s34 = sshll.u32 [#allocation3], 4
      %s35 = int_to_ptr.vmem [resolvable:$true] %s34
      %40 = dma.hbm_to_vmem [thread:$0]  %s33, 128, %s35, [#allocation4], 16, 16, 1
    $region9: #{tpu_custom_call.1} parent=1 // pred_fallthru
      _
    // Predicated region
    $region10: #{tpu_custom_call.1} parent=1 // pred_check
      _
    $region11: #{tpu_custom_call.1} parent=1 // pred_check_branch
      %42 = sbr.rel (0) target = $region13
    $region12: #{tpu_custom_call.1} parent=1 // pred_region
      _
    $region13: #{tpu_custom_call.1} parent=1 // pred_fallthru
      _
    // Predicated region
    $region14: #{tpu_custom_call.1} parent=1 // pred_check
      _
    $region15: #{tpu_custom_call.1} parent=1 // pred_check_branch
      %44 = sbr.rel (0) target = $region17
    $region16: #{tpu_custom_call.1} parent=1 // pred_region
      %46 = vsyncadd [#allocation7], 0
      %s47 = sshll.u32 %s3, 4
      %s48 = int_to_ptr.hbm [resolvable:$true] %s47
      %s49 = sshll.u32 [#allocation6], 4
      %s50 = int_to_ptr.vmem [resolvable:$true] %s49
      %55 = dma.hbm_to_vmem [thread:$0]  %s48, 256, %s50, [#allocation7], 64, 64, 4
    $region17: #{tpu_custom_call.1} parent=1 // pred_fallthru
      _
    // Predicated region
    $region18: #{tpu_custom_call.1} parent=1 // pred_check
      _
    $region19: #{tpu_custom_call.1} parent=1 // pred_check_branch
      %57 = sbr.rel (0) target = $region21
    $region20: #{tpu_custom_call.1} parent=1 // pred_region
      %59 = vsyncadd [#allocation7], 0
      %s60 = sshll.u32 %s4, 4
      %s61 = int_to_ptr.hbm [resolvable:$true] %s60
      %s62 = sshll.u32 [#allocation8], 4
      %s63 = int_to_ptr.vmem [resolvable:$true] %s62
      %68 = dma.hbm_to_vmem [thread:$0]  %s61, 256, %s63, [#allocation7], 64, 64, 4
    $region21: #{tpu_custom_call.1} parent=1 // pred_fallthru
      _
    // Predicated region
    $region22: #{tpu_custom_call.1} parent=1 // pred_check
      _
    $region23: #{tpu_custom_call.1} parent=1 // pred_check_branch
      %70 = sbr.rel (0) target = $region25
    $region24: #{tpu_custom_call.1} parent=1 // pred_region
      _
    $region25: #{tpu_custom_call.1} parent=1 // pred_fallthru
      _
    // Predicated region
    $region26: #{tpu_custom_call.1} parent=1 // pred_check
      _
    $region27: #{tpu_custom_call.1} parent=1 // pred_check_branch
      %72 = sbr.rel (0) target = $region29
    $region28: #{tpu_custom_call.1} parent=1 // pred_region
      %74 = vsyncadd [#allocation10], 0
      %s75 = sshll.u32 %s6, 4
      %s76 = int_to_ptr.hbm [resolvable:$true] %s75
      %s77 = sshll.u32 [#allocation9], 4
      %s78 = int_to_ptr.vmem [resolvable:$true] %s77
      %83 = dma.hbm_to_vmem [thread:$0]  %s76, 2048, %s78, [#allocation10], 64, 64, 4
    $region29: #{tpu_custom_call.1} parent=1 // pred_fallthru
      _
    // Predicated region
    $region30: #{tpu_custom_call.1} parent=1 // pred_check
      _
    $region31: #{tpu_custom_call.1} parent=1 // pred_check_branch
      %85 = sbr.rel (0) target = $region33
    $region32: #{tpu_custom_call.1} parent=1 // pred_region
      %87 = vsyncadd [#allocation10], 0
      %s88 = sshll.u32 %s7, 4
      %s89 = int_to_ptr.hbm [resolvable:$true] %s88
      %s90 = sshll.u32 [#allocation11], 4
      %s91 = int_to_ptr.vmem [resolvable:$true] %s90
      %96 = dma.hbm_to_vmem [thread:$0]  %s89, 2048, %s91, [#allocation10], 64, 64, 4
    $region33: #{tpu_custom_call.1} parent=1 // pred_fallthru
      _
    // Predicated region
    $region34: #{tpu_custom_call.1} parent=1 // pred_check
      _
    $region35: #{tpu_custom_call.1} parent=1 // pred_check_branch
      %98 = sbr.rel (0) target = $region37
    $region36: #{tpu_custom_call.1} parent=1 // pred_region
      %100 = vsyncadd [#allocation13], 0
      %s101 = sshll.u32 %s8, 4
      %s102 = int_to_ptr.hbm [resolvable:$true] %s101
      %s103 = sshll.u32 [#allocation12], 4
      %s104 = int_to_ptr.vmem [resolvable:$true] %s103
      %109 = dma.hbm_to_vmem [thread:$0]  %s102, 128, %s104, [#allocation13], 16, 16, 1
    $region37: #{tpu_custom_call.1} parent=1 // pred_fallthru
      _
    // Predicated region
    $region38: #{tpu_custom_call.1} parent=1 // pred_check
      _
    $region39: #{tpu_custom_call.1} parent=1 // pred_check_branch
      %111 = sbr.rel (0) target = $region41
    $region40: #{tpu_custom_call.1} parent=1 // pred_region
      %113 = vsyncadd [#allocation13], 0
      %s114 = sshll.u32 %s9, 4
      %s115 = int_to_ptr.hbm [resolvable:$true] %s114
      %s116 = sshll.u32 [#allocation14], 4
      %s117 = int_to_ptr.vmem [resolvable:$true] %s116
      %122 = dma.hbm_to_vmem [thread:$0]  %s115, 128, %s117, [#allocation13], 16, 16, 1
    $region41: #{tpu_custom_call.1} parent=1 // pred_fallthru
      _
    // Predicated region
    $region42: #{tpu_custom_call.1} parent=1 // pred_check
      _
    $region43: #{tpu_custom_call.1} parent=1 // pred_check_branch
      %124 = sbr.rel (0) target = $region45
    $region44: #{tpu_custom_call.1} parent=1 // pred_region
      _
    $region45: #{tpu_custom_call.1} parent=1 // pred_fallthru
      _
    // Predicated region
    $region46: #{tpu_custom_call.1} parent=1 // pred_check
      _
    $region47: #{tpu_custom_call.1} parent=1 // pred_check_branch
      %126 = sbr.rel (0) target = $region49
    $region48: #{tpu_custom_call.1} parent=1 // pred_region
      _
    $region49: #{tpu_custom_call.1} parent=1 // pred_fallthru
      _
    // Predicated region
    $region50: #{tpu_custom_call.1} parent=1 // pred_check
      _
    $region51: #{tpu_custom_call.1} parent=1 // pred_check_branch
      %128 = sbr.rel (0) target = $region53
    $region52: #{tpu_custom_call.1} parent=1 // pred_region
      %130 = dma.done [#allocation4], 128
    $region53: #{tpu_custom_call.1} parent=1 // pred_fallthru
      _
    // Predicated region
    $region54: #{tpu_custom_call.1} parent=1 // pred_check
      _
    $region55: #{tpu_custom_call.1} parent=1 // pred_check_branch
      %132 = sbr.rel (0) target = $region57
    $region56: #{tpu_custom_call.1} parent=1 // pred_region
      %134 = dma.done [#allocation7], 256
    $region57: #{tpu_custom_call.1} parent=1 // pred_fallthru
      _
    // Predicated region
    $region58: #{tpu_custom_call.1} parent=1 // pred_check
      _
    $region59: #{tpu_custom_call.1} parent=1 // pred_check_branch
      %136 = sbr.rel (0) target = $region61
    $region60: #{tpu_custom_call.1} parent=1 // pred_region
      %138 = dma.done [#allocation7], 256
    $region61: #{tpu_custom_call.1} parent=1 // pred_fallthru
      _
    // Predicated region
    $region62: #{tpu_custom_call.1} parent=1 // pred_check
      _
    $region63: #{tpu_custom_call.1} parent=1 // pred_check_branch
      %140 = sbr.rel (0) target = $region65
    $region64: #{tpu_custom_call.1} parent=1 // pred_region
      %142 = dma.done [#allocation10], 2048
    $region65: #{tpu_custom_call.1} parent=1 // pred_fallthru
      _
    // Predicated region
    $region66: #{tpu_custom_call.1} parent=1 // pred_check
      _
    $region67: #{tpu_custom_call.1} parent=1 // pred_check_branch
      %144 = sbr.rel (0) target = $region69
    $region68: #{tpu_custom_call.1} parent=1 // pred_region
      %146 = dma.done [#allocation10], 2048
    $region69: #{tpu_custom_call.1} parent=1 // pred_fallthru
      _
    // Predicated region
    $region70: #{tpu_custom_call.1} parent=1 // pred_check
      _
    $region71: #{tpu_custom_call.1} parent=1 // pred_check_branch
      %148 = sbr.rel (0) target = $region73
    $region72: #{tpu_custom_call.1} parent=1 // pred_region
      %150 = dma.done [#allocation13], 128
    $region73: #{tpu_custom_call.1} parent=1 // pred_fallthru
      _
    // Predicated region
    $region74: #{tpu_custom_call.1} parent=1 // pred_check
      _
    $region75: #{tpu_custom_call.1} parent=1 // pred_check_branch
      %152 = sbr.rel (0) target = $region77
    $region76: #{tpu_custom_call.1} parent=1 // pred_region
      %154 = dma.done [#allocation13], 128
    $region77: #{tpu_custom_call.1} parent=1 // pred_fallthru
      _
    %v156 = vld [vmem:[#allocation3] sm:$0x1]
    %v157 = vld [vmem:[#allocation3 + $0x1] sm:$0x1]
    %v158 = vld [vmem:[#allocation3 + $0x2] sm:$0x1]
    %v159 = vld [vmem:[#allocation3 + $0x3] sm:$0x1]
    %v160 = vld [vmem:[#allocation3 + $0x4] sm:$0x1]
    %v161 = vld [vmem:[#allocation3 + $0x5] sm:$0x1]
    %v162 = vld [vmem:[#allocation3 + $0x6] sm:$0x1]
    %v163 = vld [vmem:[#allocation3 + $0x7] sm:$0x1]
    %vm164 = vcmask 253952
    %165 = vst.msk [vmem:[#allocation16] sm:$0x1] %vm164, %v156
    %166 = vst.msk [vmem:[#allocation16 + $0x1] sm:$0x1] %vm164, %v157
    %167 = vst.msk [vmem:[#allocation16 + $0x2] sm:$0x1] %vm164, %v158
    %168 = vst.msk [vmem:[#allocation16 + $0x3] sm:$0x1] %vm164, %v159
    %169 = vst.msk [vmem:[#allocation16 + $0x4] sm:$0x1] %vm164, %v160
    %170 = vst.msk [vmem:[#allocation16 + $0x5] sm:$0x1] %vm164, %v161
    %171 = vst.msk [vmem:[#allocation16 + $0x6] sm:$0x1] %vm164, %v162
    %172 = vst.msk [vmem:[#allocation16 + $0x7] sm:$0x1] %vm164, %v163
    %v173 = vld [vmem:[%s2] sm:$0xff]
    %v174 = vld [vmem:[%s2 + $0x8] sm:$0x3]
    %v175 = vld [vmem:[#allocation6] sm:$0xf]
    %v176 = vld [vmem:[#allocation6 + $0x4] sm:$0xf]
    %v177 = vld [vmem:[#allocation6 + $0x8] sm:$0xf]
    %v178 = vld [vmem:[#allocation6 + $0xc] sm:$0xf]
    %v179 = vld [vmem:[#allocation8] sm:$0xf]
    %v180 = vld [vmem:[#allocation8 + $0x4] sm:$0xf]
    %v181 = vld [vmem:[#allocation8 + $0x8] sm:$0xf]
    %v182 = vld [vmem:[#allocation8 + $0xc] sm:$0xf]
    %v183 = vld [vmem:[%s5] sm:$0x1]
    %v184 = vld [vmem:[#allocation12] sm:$0x1]
    %v185 = vld [vmem:[#allocation12 + $0x1] sm:$0x1]
    %v186 = vld [vmem:[#allocation12 + $0x2] sm:$0x1]
    %v187 = vld [vmem:[#allocation12 + $0x3] sm:$0x1]
    %v188 = vld [vmem:[#allocation12 + $0x4] sm:$0x1]
    %v189 = vld [vmem:[#allocation12 + $0x5] sm:$0x1]
    %v190 = vld [vmem:[#allocation12 + $0x6] sm:$0x1]
    %v191 = vld [vmem:[#allocation12 + $0x7] sm:$0x1]
    %v192 = vld [vmem:[#allocation14] sm:$0x1]
    %v193 = vld [vmem:[#allocation14 + $0x1] sm:$0x1]
    %v194 = vld [vmem:[#allocation14 + $0x2] sm:$0x1]
    %v195 = vld [vmem:[#allocation14 + $0x3] sm:$0x1]
    %v196 = vld [vmem:[#allocation14 + $0x4] sm:$0x1]
    %v197 = vld [vmem:[#allocation14 + $0x5] sm:$0x1]
    %v198 = vld [vmem:[#allocation14 + $0x6] sm:$0x1]
    %v199 = vld [vmem:[#allocation14 + $0x7] sm:$0x1]
    loop: start=0, step=1, limit=6
    $region78: #{tpu_custom_call.1} parent=1 // loop_pre_header
      _
    $region79: #{tpu_custom_call.1} parent=1 // loop_header
      %s201 = sphi 0, %s205
      %p202 = scmp.ge.s32.totalorder %s201, 6
    $region80: #{tpu_custom_call.1} parent=1 // loop_header_branch
      %204 = sbr.rel (%p202) target = $region84
    $region81: #{tpu_custom_call.1} parent=1 // loop_body
      %v206 = vld [vmem:[#allocation16] sm:$0x1]
      %vm207 = vcmask 261120
      %v209 = vsel %vm207, %v206, 0
      %v212 = vsel %vm207, %v173, 0
      %v215 = vsel %vm207, %v174, 0
      %217 = vmatpush.xpose.msra.mxu0 0.0
      %218 = vmatpush.xpose.msra.mxu0 0.0
      %219 = vmatpush.xpose.msra.mxu0 0.0
      %220 = vmatpush.xpose.msra.mxu0 0.0
      %221 = vmatpush.xpose.msra.mxu0 0.0
      %222 = vmatpush.xpose.msra.mxu0 0.0
      %223 = vmatpush.xpose.msra.mxu0 0.0
      %224 = vmatpush.xpose.msra.mxu0 0.0
      %225 = vmatpush.xpose.msra.mxu0 0.0
      %226 = vmatpush.xpose.msra.mxu0 0.0
      %227 = vmatpush.xpose.msra.mxu0 0.0
      %228 = vmatpush.xpose.msra.mxu0 0.0
      %229 = vmatpush.xpose.msra.mxu0 0.0
      %230 = vmatpush.xpose.msra.mxu0 0.0
      %231 = vmatpush.xpose.msra.mxu0 %v215
      %232 = vmatpush.xpose.msra.mxu0 %v212
      %233 = vmatmul.f32.gmra.mxu0 %v209
      %v234 = vpop.f32.mrf.mxu0
      %v235 = vadd.f32 0.0, %v234
      %236 = vdwg.mxu0
      %vm237 = vcmask 73728
      %v238 = vsel %vm237, %v235, -inf
      %239 = vmax.xlane.f32.xlu0 %v238
      %v240 = vpop.xlane.xlu0 %239
      %v241 = vsub.f32 %v235, %v240
      %v242 = vmul.f32 %v241, 1.442695
      %v243 = vpow.pop %v242
      %v244 = vsel %vm237, %v243, 0.0
      %245 = vadd.xlane.f32.xlu0 %v244
      %v246 = vpop.xlane.xlu0 %245
      %v247 = vrcp.pop %v246
      %v248 = vmul.f32 %v243, %v247
      %s249 = scalar_lea.vmem [#allocation18], %s201
      %250 = vst.msk [vmem:[%s249] sm:$0x1] %vm237, %v248
      %vm251 = vcmask 80896
      %v253 = vsel %vm251, %v248, 0
      %vm255 = vcmask 1041408
      %v256 = vsel %vm255, %v174, 0
      %258 = vmatpush.msra.mxu0 0.0
      %259 = vmatpush.msra.mxu0 0.0
      %260 = vmatpush.msra.mxu0 0.0
      %261 = vmatpush.msra.mxu0 0.0
      %262 = vmatpush.msra.mxu0 0.0
      %263 = vmatpush.msra.mxu0 0.0
      %264 = vmatpush.msra.mxu0 0.0
      %265 = vmatpush.msra.mxu0 0.0
      %266 = vmatpush.msra.mxu0 0.0
      %267 = vmatpush.msra.mxu0 0.0
      %268 = vmatpush.msra.mxu0 0.0
      %269 = vmatpush.msra.mxu0 0.0
      %270 = vmatpush.msra.mxu0 0.0
      %271 = vmatpush.msra.mxu0 0.0
      %272 = vmatpush.msra.mxu0 %v256
      %273 = vmatpush.msra.mxu0 %v173
      %274 = vmatmul.f32.gmra.mxu0 %v253
      %v275 = vpop.f32.mrf.mxu0
      %v276 = vadd.f32 0.0, %v275
      %277 = vdwg.mxu0
      %s278 = scalar_lea.vmem %s0, %s201
      %v279 = vld [vmem:[%s278] sm:$0x1]
      %v280 = vpack.c.bf16 %v279, %v279
      %v281 = vpack.c.bf16 %v276, %v276
      %v286 = vunpack.c.l.b16 %v179
      %v287 = vunpack.c.l.b16 %v180
      %v288 = vunpack.c.l.b16 %v181
      %v289 = vunpack.c.l.b16 %v182
      %v290 = vpack.c.b16 %v287, %v286
      %v291 = vpack.c.b16 %v289, %v288
      %v295 = vsel %vm207, %v281, 0
      %297 = vmatpush.bf16.msra.mxu0 0
      %298 = vmatpush.bf16.msra.mxu0 0
      %299 = vmatpush.bf16.msra.mxu0 0
      %300 = vmatpush.bf16.msra.mxu0 0
      %301 = vmatpush.bf16.msra.mxu0 0
      %302 = vmatpush.bf16.msra.mxu0 0
      %303 = vmatpush.bf16.msra.mxu0 %v291
      %304 = vmatpush.bf16.msra.mxu0 %v290
      %305 = vmatmul.bf16.gmra.mxu0 %v295
      %v306 = vpop.f32.mrf.mxu0
      %v307 = vadd.f32 0.0, %v306
      %v308 = vpop.f32.mrf.mxu0
      %309 = vdwg.mxu0
      %v314 = vunpack.c.l.b16 %v175
      %v315 = vunpack.c.l.b16 %v176
      %v316 = vunpack.c.l.b16 %v177
      %v317 = vunpack.c.l.b16 %v178
      %v318 = vpack.c.b16 %v315, %v314
      %v319 = vpack.c.b16 %v317, %v316
      %v323 = vsel %vm207, %v280, 0
      %325 = vmatpush.bf16.msra.mxu0 0
      %326 = vmatpush.bf16.msra.mxu0 0
      %327 = vmatpush.bf16.msra.mxu0 0
      %328 = vmatpush.bf16.msra.mxu0 0
      %329 = vmatpush.bf16.msra.mxu0 0
      %330 = vmatpush.bf16.msra.mxu0 0
      %331 = vmatpush.bf16.msra.mxu0 %v319
      %332 = vmatpush.bf16.msra.mxu0 %v318
      %333 = vmatmul.bf16.gmra.mxu0 %v323
      %v334 = vpop.f32.mrf.mxu0
      %v335 = vadd.f32 %v307, %v334
      %v336 = vpop.f32.mrf.mxu0
      %337 = vdwg.mxu0
      %v338 = vadd.f32 %v335, %v183
      %v339 = vmax.f32 %v338, 0.0
      %v340 = vld [vmem:[#allocation16] sm:$0x1]
      %v341 = vpack.c.bf16 %v339, %v339
      %v342 = vld [vmem:[#allocation9] sm:$0xf]
      %v343 = vld [vmem:[#allocation9 + $0x4] sm:$0xf]
      %v344 = vld [vmem:[#allocation9 + $0x8] sm:$0xf]
      %v345 = vld [vmem:[#allocation9 + $0xc] sm:$0xf]
      %v350 = vunpack.c.l.b16 %v342
      %v351 = vunpack.c.l.b16 %v343
      %v352 = vunpack.c.l.b16 %v344
      %v353 = vunpack.c.l.b16 %v345
      %v354 = vpack.c.b16 %v351, %v350
      %v355 = vpack.c.b16 %v353, %v352
      %v359 = vsel %vm207, %v341, 0
      %361 = vmatpush.bf16.msra.mxu0 0
      %362 = vmatpush.bf16.msra.mxu0 0
      %363 = vmatpush.bf16.msra.mxu0 0
      %364 = vmatpush.bf16.msra.mxu0 0
      %365 = vmatpush.bf16.msra.mxu0 0
      %366 = vmatpush.bf16.msra.mxu0 0
      %367 = vmatpush.bf16.msra.mxu0 %v355
      %368 = vmatpush.bf16.msra.mxu0 %v354
      %369 = vmatmul.bf16.gmra.mxu0 %v359
      %v370 = vpop.f32.mrf.mxu0
      %v371 = vadd.f32 %v184, %v370
      %v372 = vpop.f32.mrf.mxu0
      %373 = vdwg.mxu0
      %v374 = vpack.c.bf16 %v340, %v340
      %v375 = vld [vmem:[#allocation11] sm:$0xf]
      %v376 = vld [vmem:[#allocation11 + $0x4] sm:$0xf]
      %v377 = vld [vmem:[#allocation11 + $0x8] sm:$0xf]
      %v378 = vld [vmem:[#allocation11 + $0xc] sm:$0xf]
      %v383 = vunpack.c.l.b16 %v375
      %v384 = vunpack.c.l.b16 %v376
      %v385 = vunpack.c.l.b16 %v377
      %v386 = vunpack.c.l.b16 %v378
      %v387 = vpack.c.b16 %v384, %v383
      %v388 = vpack.c.b16 %v386, %v385
      %v392 = vsel %vm207, %v374, 0
      %394 = vmatpush.bf16.msra.mxu0 0
      %395 = vmatpush.bf16.msra.mxu0 0
      %396 = vmatpush.bf16.msra.mxu0 0
      %397 = vmatpush.bf16.msra.mxu0 0
      %398 = vmatpush.bf16.msra.mxu0 0
      %399 = vmatpush.bf16.msra.mxu0 0
      %400 = vmatpush.bf16.msra.mxu0 %v388
      %401 = vmatpush.bf16.msra.mxu0 %v387
      %402 = vmatmul.bf16.gmra.mxu0 %v392
      %v403 = vpop.f32.mrf.mxu0
      %v404 = vadd.f32 %v192, %v403
      %v405 = vpop.f32.mrf.mxu0
      %406 = vdwg.mxu0
      %v407 = vadd.f32 %v371, %v404
      %v408 = vxor.u32 %v407, 2147483648
      %v409 = vmul.f32 %v408, 1.442695
      %v410 = vpow.pop %v409
      %v411 = vadd.f32 %v410, 1.0
      %v412 = vrcp.pop %v411
      %v413 = vmul.f32 %v411, %v412
      %v414 = vsub.f32 1.0, %v413
      %v415 = vmul.f32 %v412, %v414
      %v416 = vadd.f32 %v412, %v415
      %vm417 = vweird.f32 %v411
      %vm418 = vweird.f32 %v412
      %vm419 = vmor %vm417, %vm418
      %v420 = vsel %vm419, %v412, %v416
      %v421 = vand.u32 2147483647, %v411
      %vm422 = vcmp.eq.f32.partialorder %v421, 8.507059e+37
      %v423 = vand.u32 %v411, 2147483648
      %v424 = vor.u32 1.1754944e-38, %v423
      %v425 = vsel %vm422, %v424, %v420
      %v426 = vmul.f32 1.0, %v425
      %428 = vrot.lane.b32.xlu0 %v404, 64
      %v429 = vpop.permute.xlu0 %428
      %v431 = vmul.f32 %v426, %v429
      %433 = vrot.lane.b32.xlu0 %v431, 64
      %v434 = vpop.permute.xlu0 %433
      %v436 = vadd.f32 %v371, %v434
      %v437 = vtanh.pop %v436
      %v438 = vsub.f32 1.0, %v426
      %440 = vrot.lane.b32.xlu0 %v437, 96
      %v441 = vpop.permute.xlu0 %440
      %v443 = vmul.f32 %v438, %v441
      %v445 = vperm.slane %v340, 0
      %446 = vrot.lane.b32.xlu0 %v445, 32
      %v447 = vpop.permute.xlu0 %446
      %v449 = vmul.f32 %v426, %v447
      %v450 = vadd.f32 %v443, %v449
      %452 = vrot.lane.b32.xlu0 %v450, 96
      %v453 = vpop.permute.xlu0 %452
      %455 = vst.msk [vmem:[#allocation16] sm:$0x1] %vm164, %v453
      %s456 = scalar_lea.vmem [#allocation16], 1
      %v457 = vld [vmem:[%s456] sm:$0x1]
      %v458 = vpack.c.bf16 %v450, %v450
      %s459 = scalar_lea.vmem [#allocation9], 16
      %v460 = vld [vmem:[%s459] sm:$0xf]
      %v461 = vld [vmem:[%s459 + $0x4] sm:$0xf]
      %v462 = vld [vmem:[%s459 + $0x8] sm:$0xf]
      %v463 = vld [vmem:[%s459 + $0xc] sm:$0xf]
      %465 = vrot.lane.b32.xlu0 %v458, 96
      %v466 = vpop.permute.xlu0 %465
      %v471 = vunpack.c.l.b16 %v460
      %v472 = vunpack.c.l.b16 %v461
      %v473 = vunpack.c.l.b16 %v462
      %v474 = vunpack.c.l.b16 %v463
      %v475 = vpack.c.b16 %v472, %v471
      %v476 = vpack.c.b16 %v474, %v473
      %v480 = vsel %vm207, %v466, 0
      %482 = vmatpush.bf16.msra.mxu0 0
      %483 = vmatpush.bf16.msra.mxu0 0
      %484 = vmatpush.bf16.msra.mxu0 0
      %485 = vmatpush.bf16.msra.mxu0 0
      %486 = vmatpush.bf16.msra.mxu0 0
      %487 = vmatpush.bf16.msra.mxu0 0
      %488 = vmatpush.bf16.msra.mxu0 %v476
      %489 = vmatpush.bf16.msra.mxu0 %v475
      %490 = vmatmul.bf16.gmra.mxu0 %v480
      %v491 = vpop.f32.mrf.mxu0
      %v492 = vadd.f32 %v185, %v491
      %v493 = vpop.f32.mrf.mxu0
      %494 = vdwg.mxu0
      %v495 = vpack.c.bf16 %v457, %v457
      %s496 = scalar_lea.vmem [#allocation11], 16
      %v497 = vld [vmem:[%s496] sm:$0xf]
      %v498 = vld [vmem:[%s496 + $0x4] sm:$0xf]
      %v499 = vld [vmem:[%s496 + $0x8] sm:$0xf]
      %v500 = vld [vmem:[%s496 + $0xc] sm:$0xf]
      %v505 = vunpack.c.l.b16 %v497
      %v506 = vunpack.c.l.b16 %v498
      %v507 = vunpack.c.l.b16 %v499
      %v508 = vunpack.c.l.b16 %v500
      %v509 = vpack.c.b16 %v506, %v505
      %v510 = vpack.c.b16 %v508, %v507
      %v514 = vsel %vm207, %v495, 0
      %516 = vmatpush.bf16.msra.mxu0 0
      %517 = vmatpush.bf16.msra.mxu0 0
      %518 = vmatpush.bf16.msra.mxu0 0
      %519 = vmatpush.bf16.msra.mxu0 0
      %520 = vmatpush.bf16.msra.mxu0 0
      %521 = vmatpush.bf16.msra.mxu0 0
      %522 = vmatpush.bf16.msra.mxu0 %v510
      %523 = vmatpush.bf16.msra.mxu0 %v509
      %524 = vmatmul.bf16.gmra.mxu0 %v514
      %v525 = vpop.f32.mrf.mxu0
      %v526 = vadd.f32 %v193, %v525
      %v527 = vpop.f32.mrf.mxu0
      %528 = vdwg.mxu0
      %v529 = vadd.f32 %v492, %v526
      %v530 = vxor.u32 %v529, 2147483648
      %v531 = vmul.f32 %v530, 1.442695
      %v532 = vpow.pop %v531
      %v533 = vadd.f32 %v532, 1.0
      %v534 = vrcp.pop %v533
      %v535 = vmul.f32 %v533, %v534
      %v536 = vsub.f32 1.0, %v535
      %v537 = vmul.f32 %v534, %v536
      %v538 = vadd.f32 %v534, %v537
      %vm539 = vweird.f32 %v533
      %vm540 = vweird.f32 %v534
      %vm541 = vmor %vm539, %vm540
      %v542 = vsel %vm541, %v534, %v538
      %v543 = vand.u32 2147483647, %v533
      %vm544 = vcmp.eq.f32.partialorder %v543, 8.507059e+37
      %v545 = vand.u32 %v533, 2147483648
      %v546 = vor.u32 1.1754944e-38, %v545
      %v547 = vsel %vm544, %v546, %v542
      %v548 = vmul.f32 1.0, %v547
      %550 = vrot.lane.b32.xlu0 %v526, 64
      %v551 = vpop.permute.xlu0 %550
      %v553 = vmul.f32 %v548, %v551
      %555 = vrot.lane.b32.xlu0 %v553, 64
      %v556 = vpop.permute.xlu0 %555
      %v558 = vadd.f32 %v492, %v556
      %v559 = vtanh.pop %v558
      %v560 = vsub.f32 1.0, %v548
      %562 = vrot.lane.b32.xlu0 %v559, 96
      %v563 = vpop.permute.xlu0 %562
      %v565 = vmul.f32 %v560, %v563
      %v567 = vperm.slane %v457, 0
      %568 = vrot.lane.b32.xlu0 %v567, 32
      %v569 = vpop.permute.xlu0 %568
      %v571 = vmul.f32 %v548, %v569
      %v572 = vadd.f32 %v565, %v571
      %574 = vrot.lane.b32.xlu0 %v572, 96
      %v575 = vpop.permute.xlu0 %574
      %577 = vst.msk [vmem:[%s456] sm:$0x1] %vm164, %v575
      %s578 = scalar_lea.vmem [#allocation16], 2
      %v579 = vld [vmem:[%s578] sm:$0x1]
      %v580 = vpack.c.bf16 %v572, %v572
      %s581 = scalar_lea.vmem [#allocation9], 32
      %v582 = vld [vmem:[%s581] sm:$0xf]
      %v583 = vld [vmem:[%s581 + $0x4] sm:$0xf]
      %v584 = vld [vmem:[%s581 + $0x8] sm:$0xf]
      %v585 = vld [vmem:[%s581 + $0xc] sm:$0xf]
      %587 = vrot.lane.b32.xlu0 %v580, 96
      %v588 = vpop.permute.xlu0 %587
      %v593 = vunpack.c.l.b16 %v582
      %v594 = vunpack.c.l.b16 %v583
      %v595 = vunpack.c.l.b16 %v584
      %v596 = vunpack.c.l.b16 %v585
      %v597 = vpack.c.b16 %v594, %v593
      %v598 = vpack.c.b16 %v596, %v595
      %v602 = vsel %vm207, %v588, 0
      %604 = vmatpush.bf16.msra.mxu0 0
      %605 = vmatpush.bf16.msra.mxu0 0
      %606 = vmatpush.bf16.msra.mxu0 0
      %607 = vmatpush.bf16.msra.mxu0 0
      %608 = vmatpush.bf16.msra.mxu0 0
      %609 = vmatpush.bf16.msra.mxu0 0
      %610 = vmatpush.bf16.msra.mxu0 %v598
      %611 = vmatpush.bf16.msra.mxu0 %v597
      %612 = vmatmul.bf16.gmra.mxu0 %v602
      %v613 = vpop.f32.mrf.mxu0
      %v614 = vadd.f32 %v186, %v613
      %v615 = vpop.f32.mrf.mxu0
      %616 = vdwg.mxu0
      %v617 = vpack.c.bf16 %v579, %v579
      %s618 = scalar_lea.vmem [#allocation11], 32
      %v619 = vld [vmem:[%s618] sm:$0xf]
      %v620 = vld [vmem:[%s618 + $0x4] sm:$0xf]
      %v621 = vld [vmem:[%s618 + $0x8] sm:$0xf]
      %v622 = vld [vmem:[%s618 + $0xc] sm:$0xf]
      %v627 = vunpack.c.l.b16 %v619
      %v628 = vunpack.c.l.b16 %v620
      %v629 = vunpack.c.l.b16 %v621
      %v630 = vunpack.c.l.b16 %v622
      %v631 = vpack.c.b16 %v628, %v627
      %v632 = vpack.c.b16 %v630, %v629
      %v636 = vsel %vm207, %v617, 0
      %638 = vmatpush.bf16.msra.mxu0 0
      %639 = vmatpush.bf16.msra.mxu0 0
      %640 = vmatpush.bf16.msra.mxu0 0
      %641 = vmatpush.bf16.msra.mxu0 0
      %642 = vmatpush.bf16.msra.mxu0 0
      %643 = vmatpush.bf16.msra.mxu0 0
      %644 = vmatpush.bf16.msra.mxu0 %v632
      %645 = vmatpush.bf16.msra.mxu0 %v631
      %646 = vmatmul.bf16.gmra.mxu0 %v636
      %v647 = vpop.f32.mrf.mxu0
      %v648 = vadd.f32 %v194, %v647
      %v649 = vpop.f32.mrf.mxu0
      %650 = vdwg.mxu0
      %v651 = vadd.f32 %v614, %v648
      %v652 = vxor.u32 %v651, 2147483648
      %v653 = vmul.f32 %v652, 1.442695
      %v654 = vpow.pop %v653
      %v655 = vadd.f32 %v654, 1.0
      %v656 = vrcp.pop %v655
      %v657 = vmul.f32 %v655, %v656
      %v658 = vsub.f32 1.0, %v657
      %v659 = vmul.f32 %v656, %v658
      %v660 = vadd.f32 %v656, %v659
      %vm661 = vweird.f32 %v655
      %vm662 = vweird.f32 %v656
      %vm663 = vmor %vm661, %vm662
      %v664 = vsel %vm663, %v656, %v660
      %v665 = vand.u32 2147483647, %v655
      %vm666 = vcmp.eq.f32.partialorder %v665, 8.507059e+37
      %v667 = vand.u32 %v655, 2147483648
      %v668 = vor.u32 1.1754944e-38, %v667
      %v669 = vsel %vm666, %v668, %v664
      %v670 = vmul.f32 1.0, %v669
      %672 = vrot.lane.b32.xlu0 %v648, 64
      %v673 = vpop.permute.xlu0 %672
      %v675 = vmul.f32 %v670, %v673
      %677 = vrot.lane.b32.xlu0 %v675, 64
      %v678 = vpop.permute.xlu0 %677
      %v680 = vadd.f32 %v614, %v678
      %v681 = vtanh.pop %v680
      %v682 = vsub.f32 1.0, %v670
      %684 = vrot.lane.b32.xlu0 %v681, 96
      %v685 = vpop.permute.xlu0 %684
      %v687 = vmul.f32 %v682, %v685
      %v689 = vperm.slane %v579, 0
      %690 = vrot.lane.b32.xlu0 %v689, 32
      %v691 = vpop.permute.xlu0 %690
      %v693 = vmul.f32 %v670, %v691
      %v694 = vadd.f32 %v687, %v693
      %696 = vrot.lane.b32.xlu0 %v694, 96
      %v697 = vpop.permute.xlu0 %696
      %699 = vst.msk [vmem:[%s578] sm:$0x1] %vm164, %v697
      %s700 = scalar_lea.vmem [#allocation16], 3
      %v701 = vld [vmem:[%s700] sm:$0x1]
      %v702 = vpack.c.bf16 %v694, %v694
      %s703 = scalar_lea.vmem [#allocation9], 48
      %v704 = vld [vmem:[%s703] sm:$0xf]
      %v705 = vld [vmem:[%s703 + $0x4] sm:$0xf]
      %v706 = vld [vmem:[%s703 + $0x8] sm:$0xf]
      %v707 = vld [vmem:[%s703 + $0xc] sm:$0xf]
      %709 = vrot.lane.b32.xlu0 %v702, 96
      %v710 = vpop.permute.xlu0 %709
      %v715 = vunpack.c.l.b16 %v704
      %v716 = vunpack.c.l.b16 %v705
      %v717 = vunpack.c.l.b16 %v706
      %v718 = vunpack.c.l.b16 %v707
      %v719 = vpack.c.b16 %v716, %v715
      %v720 = vpack.c.b16 %v718, %v717
      %v724 = vsel %vm207, %v710, 0
      %726 = vmatpush.bf16.msra.mxu0 0
      %727 = vmatpush.bf16.msra.mxu0 0
      %728 = vmatpush.bf16.msra.mxu0 0
      %729 = vmatpush.bf16.msra.mxu0 0
      %730 = vmatpush.bf16.msra.mxu0 0
      %731 = vmatpush.bf16.msra.mxu0 0
      %732 = vmatpush.bf16.msra.mxu0 %v720
      %733 = vmatpush.bf16.msra.mxu0 %v719
      %734 = vmatmul.bf16.gmra.mxu0 %v724
      %v735 = vpop.f32.mrf.mxu0
      %v736 = vadd.f32 %v187, %v735
      %v737 = vpop.f32.mrf.mxu0
      %738 = vdwg.mxu0
      %v739 = vpack.c.bf16 %v701, %v701
      %s740 = scalar_lea.vmem [#allocation11], 48
      %v741 = vld [vmem:[%s740] sm:$0xf]
      %v742 = vld [vmem:[%s740 + $0x4] sm:$0xf]
      %v743 = vld [vmem:[%s740 + $0x8] sm:$0xf]
      %v744 = vld [vmem:[%s740 + $0xc] sm:$0xf]
      %v749 = vunpack.c.l.b16 %v741
      %v750 = vunpack.c.l.b16 %v742
      %v751 = vunpack.c.l.b16 %v743
      %v752 = vunpack.c.l.b16 %v744
      %v753 = vpack.c.b16 %v750, %v749
      %v754 = vpack.c.b16 %v752, %v751
      %v758 = vsel %vm207, %v739, 0
      %760 = vmatpush.bf16.msra.mxu0 0
      %761 = vmatpush.bf16.msra.mxu0 0
      %762 = vmatpush.bf16.msra.mxu0 0
      %763 = vmatpush.bf16.msra.mxu0 0
      %764 = vmatpush.bf16.msra.mxu0 0
      %765 = vmatpush.bf16.msra.mxu0 0
      %766 = vmatpush.bf16.msra.mxu0 %v754
      %767 = vmatpush.bf16.msra.mxu0 %v753
      %768 = vmatmul.bf16.gmra.mxu0 %v758
      %v769 = vpop.f32.mrf.mxu0
      %v770 = vadd.f32 %v195, %v769
      %v771 = vpop.f32.mrf.mxu0
      %772 = vdwg.mxu0
      %v773 = vadd.f32 %v736, %v770
      %v774 = vxor.u32 %v773, 2147483648
      %v775 = vmul.f32 %v774, 1.442695
      %v776 = vpow.pop %v775
      %v777 = vadd.f32 %v776, 1.0
      %v778 = vrcp.pop %v777
      %v779 = vmul.f32 %v777, %v778
      %v780 = vsub.f32 1.0, %v779
      %v781 = vmul.f32 %v778, %v780
      %v782 = vadd.f32 %v778, %v781
      %vm783 = vweird.f32 %v777
      %vm784 = vweird.f32 %v778
      %vm785 = vmor %vm783, %vm784
      %v786 = vsel %vm785, %v778, %v782
      %v787 = vand.u32 2147483647, %v777
      %vm788 = vcmp.eq.f32.partialorder %v787, 8.507059e+37
      %v789 = vand.u32 %v777, 2147483648
      %v790 = vor.u32 1.1754944e-38, %v789
      %v791 = vsel %vm788, %v790, %v786
      %v792 = vmul.f32 1.0, %v791
      %794 = vrot.lane.b32.xlu0 %v770, 64
      %v795 = vpop.permute.xlu0 %794
      %v797 = vmul.f32 %v792, %v795
      %799 = vrot.lane.b32.xlu0 %v797, 64
      %v800 = vpop.permute.xlu0 %799
      %v802 = vadd.f32 %v736, %v800
      %v803 = vtanh.pop %v802
      %v804 = vsub.f32 1.0, %v792
      %806 = vrot.lane.b32.xlu0 %v803, 96
      %v807 = vpop.permute.xlu0 %806
      %v809 = vmul.f32 %v804, %v807
      %v811 = vperm.slane %v701, 0
      %812 = vrot.lane.b32.xlu0 %v811, 32
      %v813 = vpop.permute.xlu0 %812
      %v815 = vmul.f32 %v792, %v813
      %v816 = vadd.f32 %v809, %v815
      %818 = vrot.lane.b32.xlu0 %v816, 96
      %v819 = vpop.permute.xlu0 %818
      %821 = vst.msk [vmem:[%s700] sm:$0x1] %vm164, %v819
      %s822 = scalar_lea.vmem [#allocation16], 4
      %v823 = vld [vmem:[%s822] sm:$0x1]
      %v824 = vpack.c.bf16 %v816, %v816
      %s825 = scalar_lea.vmem [#allocation9], 64
      %v826 = vld [vmem:[%s825] sm:$0xf]
      %v827 = vld [vmem:[%s825 + $0x4] sm:$0xf]
      %v828 = vld [vmem:[%s825 + $0x8] sm:$0xf]
      %v829 = vld [vmem:[%s825 + $0xc] sm:$0xf]
      %831 = vrot.lane.b32.xlu0 %v824, 96
      %v832 = vpop.permute.xlu0 %831
      %v837 = vunpack.c.l.b16 %v826
      %v838 = vunpack.c.l.b16 %v827
      %v839 = vunpack.c.l.b16 %v828
      %v840 = vunpack.c.l.b16 %v829
      %v841 = vpack.c.b16 %v838, %v837
      %v842 = vpack.c.b16 %v840, %v839
      %v846 = vsel %vm207, %v832, 0
      %848 = vmatpush.bf16.msra.mxu0 0
      %849 = vmatpush.bf16.msra.mxu0 0
      %850 = vmatpush.bf16.msra.mxu0 0
      %851 = vmatpush.bf16.msra.mxu0 0
      %852 = vmatpush.bf16.msra.mxu0 0
      %853 = vmatpush.bf16.msra.mxu0 0
      %854 = vmatpush.bf16.msra.mxu0 %v842
      %855 = vmatpush.bf16.msra.mxu0 %v841
      %856 = vmatmul.bf16.gmra.mxu0 %v846
      %v857 = vpop.f32.mrf.mxu0
      %v858 = vadd.f32 %v188, %v857
      %v859 = vpop.f32.mrf.mxu0
      %860 = vdwg.mxu0
      %v861 = vpack.c.bf16 %v823, %v823
      %s862 = scalar_lea.vmem [#allocation11], 64
      %v863 = vld [vmem:[%s862] sm:$0xf]
      %v864 = vld [vmem:[%s862 + $0x4] sm:$0xf]
      %v865 = vld [vmem:[%s862 + $0x8] sm:$0xf]
      %v866 = vld [vmem:[%s862 + $0xc] sm:$0xf]
      %v871 = vunpack.c.l.b16 %v863
      %v872 = vunpack.c.l.b16 %v864
      %v873 = vunpack.c.l.b16 %v865
      %v874 = vunpack.c.l.b16 %v866
      %v875 = vpack.c.b16 %v872, %v871
      %v876 = vpack.c.b16 %v874, %v873
      %v880 = vsel %vm207, %v861, 0
      %882 = vmatpush.bf16.msra.mxu0 0
      %883 = vmatpush.bf16.msra.mxu0 0
      %884 = vmatpush.bf16.msra.mxu0 0
      %885 = vmatpush.bf16.msra.mxu0 0
      %886 = vmatpush.bf16.msra.mxu0 0
      %887 = vmatpush.bf16.msra.mxu0 0
      %888 = vmatpush.bf16.msra.mxu0 %v876
      %889 = vmatpush.bf16.msra.mxu0 %v875
      %890 = vmatmul.bf16.gmra.mxu0 %v880
      %v891 = vpop.f32.mrf.mxu0
      %v892 = vadd.f32 %v196, %v891
      %v893 = vpop.f32.mrf.mxu0
      %894 = vdwg.mxu0
      %v895 = vadd.f32 %v858, %v892
      %v896 = vxor.u32 %v895, 2147483648
      %v897 = vmul.f32 %v896, 1.442695
      %v898 = vpow.pop %v897
      %v899 = vadd.f32 %v898, 1.0
      %v900 = vrcp.pop %v899
      %v901 = vmul.f32 %v899, %v900
      %v902 = vsub.f32 1.0, %v901
      %v903 = vmul.f32 %v900, %v902
      %v904 = vadd.f32 %v900, %v903
      %vm905 = vweird.f32 %v899
      %vm906 = vweird.f32 %v900
      %vm907 = vmor %vm905, %vm906
      %v908 = vsel %vm907, %v900, %v904
      %v909 = vand.u32 2147483647, %v899
      %vm910 = vcmp.eq.f32.partialorder %v909, 8.507059e+37
      %v911 = vand.u32 %v899, 2147483648
      %v912 = vor.u32 1.1754944e-38, %v911
      %v913 = vsel %vm910, %v912, %v908
      %v914 = vmul.f32 1.0, %v913
      %916 = vrot.lane.b32.xlu0 %v892, 64
      %v917 = vpop.permute.xlu0 %916
      %v919 = vmul.f32 %v914, %v917
      %921 = vrot.lane.b32.xlu0 %v919, 64
      %v922 = vpop.permute.xlu0 %921
      %v924 = vadd.f32 %v858, %v922
      %v925 = vtanh.pop %v924
      %v926 = vsub.f32 1.0, %v914
      %928 = vrot.lane.b32.xlu0 %v925, 96
      %v929 = vpop.permute.xlu0 %928
      %v931 = vmul.f32 %v926, %v929
      %v933 = vperm.slane %v823, 0
      %934 = vrot.lane.b32.xlu0 %v933, 32
      %v935 = vpop.permute.xlu0 %934
      %v937 = vmul.f32 %v914, %v935
      %v938 = vadd.f32 %v931, %v937
      %940 = vrot.lane.b32.xlu0 %v938, 96
      %v941 = vpop.permute.xlu0 %940
      %943 = vst.msk [vmem:[%s822] sm:$0x1] %vm164, %v941
      %s944 = scalar_lea.vmem [#allocation16], 5
      %v945 = vld [vmem:[%s944] sm:$0x1]
      %v946 = vpack.c.bf16 %v938, %v938
      %s947 = scalar_lea.vmem [#allocation9], 80
      %v948 = vld [vmem:[%s947] sm:$0xf]
      %v949 = vld [vmem:[%s947 + $0x4] sm:$0xf]
      %v950 = vld [vmem:[%s947 + $0x8] sm:$0xf]
      %v951 = vld [vmem:[%s947 + $0xc] sm:$0xf]
      %953 = vrot.lane.b32.xlu0 %v946, 96
      %v954 = vpop.permute.xlu0 %953
      %v959 = vunpack.c.l.b16 %v948
      %v960 = vunpack.c.l.b16 %v949
      %v961 = vunpack.c.l.b16 %v950
      %v962 = vunpack.c.l.b16 %v951
      %v963 = vpack.c.b16 %v960, %v959
      %v964 = vpack.c.b16 %v962, %v961
      %v968 = vsel %vm207, %v954, 0
      %970 = vmatpush.bf16.msra.mxu0 0
      %971 = vmatpush.bf16.msra.mxu0 0
      %972 = vmatpush.bf16.msra.mxu0 0
      %973 = vmatpush.bf16.msra.mxu0 0
      %974 = vmatpush.bf16.msra.mxu0 0
      %975 = vmatpush.bf16.msra.mxu0 0
      %976 = vmatpush.bf16.msra.mxu0 %v964
      %977 = vmatpush.bf16.msra.mxu0 %v963
      %978 = vmatmul.bf16.gmra.mxu0 %v968
      %v979 = vpop.f32.mrf.mxu0
      %v980 = vadd.f32 %v189, %v979
      %v981 = vpop.f32.mrf.mxu0
      %982 = vdwg.mxu0
      %v983 = vpack.c.bf16 %v945, %v945
      %s984 = scalar_lea.vmem [#allocation11], 80
      %v985 = vld [vmem:[%s984] sm:$0xf]
      %v986 = vld [vmem:[%s984 + $0x4] sm:$0xf]
      %v987 = vld [vmem:[%s984 + $0x8] sm:$0xf]
      %v988 = vld [vmem:[%s984 + $0xc] sm:$0xf]
      %v993 = vunpack.c.l.b16 %v985
      %v994 = vunpack.c.l.b16 %v986
      %v995 = vunpack.c.l.b16 %v987
      %v996 = vunpack.c.l.b16 %v988
      %v997 = vpack.c.b16 %v994, %v993
      %v998 = vpack.c.b16 %v996, %v995
      %v1002 = vsel %vm207, %v983, 0
      %1004 = vmatpush.bf16.msra.mxu0 0
      %1005 = vmatpush.bf16.msra.mxu0 0
      %1006 = vmatpush.bf16.msra.mxu0 0
      %1007 = vmatpush.bf16.msra.mxu0 0
      %1008 = vmatpush.bf16.msra.mxu0 0
      %1009 = vmatpush.bf16.msra.mxu0 0
      %1010 = vmatpush.bf16.msra.mxu0 %v998
      %1011 = vmatpush.bf16.msra.mxu0 %v997
      %1012 = vmatmul.bf16.gmra.mxu0 %v1002
      %v1013 = vpop.f32.mrf.mxu0
      %v1014 = vadd.f32 %v197, %v1013
      %v1015 = vpop.f32.mrf.mxu0
      %1016 = vdwg.mxu0
      %v1017 = vadd.f32 %v980, %v1014
      %v1018 = vxor.u32 %v1017, 2147483648
      %v1019 = vmul.f32 %v1018, 1.442695
      %v1020 = vpow.pop %v1019
      %v1021 = vadd.f32 %v1020, 1.0
      %v1022 = vrcp.pop %v1021
      %v1023 = vmul.f32 %v1021, %v1022
      %v1024 = vsub.f32 1.0, %v1023
      %v1025 = vmul.f32 %v1022, %v1024
      %v1026 = vadd.f32 %v1022, %v1025
      %vm1027 = vweird.f32 %v1021
      %vm1028 = vweird.f32 %v1022
      %vm1029 = vmor %vm1027, %vm1028
      %v1030 = vsel %vm1029, %v1022, %v1026
      %v1031 = vand.u32 2147483647, %v1021
      %vm1032 = vcmp.eq.f32.partialorder %v1031, 8.507059e+37
      %v1033 = vand.u32 %v1021, 2147483648
      %v1034 = vor.u32 1.1754944e-38, %v1033
      %v1035 = vsel %vm1032, %v1034, %v1030
      %v1036 = vmul.f32 1.0, %v1035
      %1038 = vrot.lane.b32.xlu0 %v1014, 64
      %v1039 = vpop.permute.xlu0 %1038
      %v1041 = vmul.f32 %v1036, %v1039
      %1043 = vrot.lane.b32.xlu0 %v1041, 64
      %v1044 = vpop.permute.xlu0 %1043
      %v1046 = vadd.f32 %v980, %v1044
      %v1047 = vtanh.pop %v1046
      %v1048 = vsub.f32 1.0, %v1036
      %1050 = vrot.lane.b32.xlu0 %v1047, 96
      %v1051 = vpop.permute.xlu0 %1050
      %v1053 = vmul.f32 %v1048, %v1051
      %v1055 = vperm.slane %v945, 0
      %1056 = vrot.lane.b32.xlu0 %v1055, 32
      %v1057 = vpop.permute.xlu0 %1056
      %v1059 = vmul.f32 %v1036, %v1057
      %v1060 = vadd.f32 %v1053, %v1059
      %1062 = vrot.lane.b32.xlu0 %v1060, 96
      %v1063 = vpop.permute.xlu0 %1062
      %1065 = vst.msk [vmem:[%s944] sm:$0x1] %vm164, %v1063
      %s1066 = scalar_lea.vmem [#allocation16], 6
      %v1067 = vld [vmem:[%s1066] sm:$0x1]
      %v1068 = vpack.c.bf16 %v1060, %v1060
      %s1069 = scalar_lea.vmem [#allocation9], 96
      %v1070 = vld [vmem:[%s1069] sm:$0xf]
      %v1071 = vld [vmem:[%s1069 + $0x4] sm:$0xf]
      %v1072 = vld [vmem:[%s1069 + $0x8] sm:$0xf]
      %v1073 = vld [vmem:[%s1069 + $0xc] sm:$0xf]
      %1075 = vrot.lane.b32.xlu0 %v1068, 96
      %v1076 = vpop.permute.xlu0 %1075
      %v1081 = vunpack.c.l.b16 %v1070
      %v1082 = vunpack.c.l.b16 %v1071
      %v1083 = vunpack.c.l.b16 %v1072
      %v1084 = vunpack.c.l.b16 %v1073
      %v1085 = vpack.c.b16 %v1082, %v1081
      %v1086 = vpack.c.b16 %v1084, %v1083
      %v1090 = vsel %vm207, %v1076, 0
      %1092 = vmatpush.bf16.msra.mxu0 0
      %1093 = vmatpush.bf16.msra.mxu0 0
      %1094 = vmatpush.bf16.msra.mxu0 0
      %1095 = vmatpush.bf16.msra.mxu0 0
      %1096 = vmatpush.bf16.msra.mxu0 0
      %1097 = vmatpush.bf16.msra.mxu0 0
      %1098 = vmatpush.bf16.msra.mxu0 %v1086
      %1099 = vmatpush.bf16.msra.mxu0 %v1085
      %1100 = vmatmul.bf16.gmra.mxu0 %v1090
      %v1101 = vpop.f32.mrf.mxu0
      %v1102 = vadd.f32 %v190, %v1101
      %v1103 = vpop.f32.mrf.mxu0
      %1104 = vdwg.mxu0
      %v1105 = vpack.c.bf16 %v1067, %v1067
      %s1106 = scalar_lea.vmem [#allocation11], 96
      %v1107 = vld [vmem:[%s1106] sm:$0xf]
      %v1108 = vld [vmem:[%s1106 + $0x4] sm:$0xf]
      %v1109 = vld [vmem:[%s1106 + $0x8] sm:$0xf]
      %v1110 = vld [vmem:[%s1106 + $0xc] sm:$0xf]
      %v1115 = vunpack.c.l.b16 %v1107
      %v1116 = vunpack.c.l.b16 %v1108
      %v1117 = vunpack.c.l.b16 %v1109
      %v1118 = vunpack.c.l.b16 %v1110
      %v1119 = vpack.c.b16 %v1116, %v1115
      %v1120 = vpack.c.b16 %v1118, %v1117
      %v1124 = vsel %vm207, %v1105, 0
      %1126 = vmatpush.bf16.msra.mxu0 0
      %1127 = vmatpush.bf16.msra.mxu0 0
      %1128 = vmatpush.bf16.msra.mxu0 0
      %1129 = vmatpush.bf16.msra.mxu0 0
      %1130 = vmatpush.bf16.msra.mxu0 0
      %1131 = vmatpush.bf16.msra.mxu0 0
      %1132 = vmatpush.bf16.msra.mxu0 %v1120
      %1133 = vmatpush.bf16.msra.mxu0 %v1119
      %1134 = vmatmul.bf16.gmra.mxu0 %v1124
      %v1135 = vpop.f32.mrf.mxu0
      %v1136 = vadd.f32 %v198, %v1135
      %v1137 = vpop.f32.mrf.mxu0
      %1138 = vdwg.mxu0
      %v1139 = vadd.f32 %v1102, %v1136
      %v1140 = vxor.u32 %v1139, 2147483648
      %v1141 = vmul.f32 %v1140, 1.442695
      %v1142 = vpow.pop %v1141
      %v1143 = vadd.f32 %v1142, 1.0
      %v1144 = vrcp.pop %v1143
      %v1145 = vmul.f32 %v1143, %v1144
      %v1146 = vsub.f32 1.0, %v1145
      %v1147 = vmul.f32 %v1144, %v1146
      %v1148 = vadd.f32 %v1144, %v1147
      %vm1149 = vweird.f32 %v1143
      %vm1150 = vweird.f32 %v1144
      %vm1151 = vmor %vm1149, %vm1150
      %v1152 = vsel %vm1151, %v1144, %v1148
      %v1153 = vand.u32 2147483647, %v1143
      %vm1154 = vcmp.eq.f32.partialorder %v1153, 8.507059e+37
      %v1155 = vand.u32 %v1143, 2147483648
      %v1156 = vor.u32 1.1754944e-38, %v1155
      %v1157 = vsel %vm1154, %v1156, %v1152
      %v1158 = vmul.f32 1.0, %v1157
      %1160 = vrot.lane.b32.xlu0 %v1136, 64
      %v1161 = vpop.permute.xlu0 %1160
      %v1163 = vmul.f32 %v1158, %v1161
      %1165 = vrot.lane.b32.xlu0 %v1163, 64
      %v1166 = vpop.permute.xlu0 %1165
      %v1168 = vadd.f32 %v1102, %v1166
      %v1169 = vtanh.pop %v1168
      %v1170 = vsub.f32 1.0, %v1158
      %1172 = vrot.lane.b32.xlu0 %v1169, 96
      %v1173 = vpop.permute.xlu0 %1172
      %v1175 = vmul.f32 %v1170, %v1173
      %v1177 = vperm.slane %v1067, 0
      %1178 = vrot.lane.b32.xlu0 %v1177, 32
      %v1179 = vpop.permute.xlu0 %1178
      %v1181 = vmul.f32 %v1158, %v1179
      %v1182 = vadd.f32 %v1175, %v1181
      %1184 = vrot.lane.b32.xlu0 %v1182, 96
      %v1185 = vpop.permute.xlu0 %1184
      %1187 = vst.msk [vmem:[%s1066] sm:$0x1] %vm164, %v1185
      %s1188 = scalar_lea.vmem [#allocation16], 7
      %v1189 = vld [vmem:[%s1188] sm:$0x1]
      %v1190 = vpack.c.bf16 %v1182, %v1182
      %s1191 = scalar_lea.vmem [#allocation9], 112
      %v1192 = vld [vmem:[%s1191] sm:$0xf]
      %v1193 = vld [vmem:[%s1191 + $0x4] sm:$0xf]
      %v1194 = vld [vmem:[%s1191 + $0x8] sm:$0xf]
      %v1195 = vld [vmem:[%s1191 + $0xc] sm:$0xf]
      %1197 = vrot.lane.b32.xlu0 %v1190, 96
      %v1198 = vpop.permute.xlu0 %1197
      %v1203 = vunpack.c.l.b16 %v1192
      %v1204 = vunpack.c.l.b16 %v1193
      %v1205 = vunpack.c.l.b16 %v1194
      %v1206 = vunpack.c.l.b16 %v1195
      %v1207 = vpack.c.b16 %v1204, %v1203
      %v1208 = vpack.c.b16 %v1206, %v1205
      %v1212 = vsel %vm207, %v1198, 0
      %1214 = vmatpush.bf16.msra.mxu0 0
      %1215 = vmatpush.bf16.msra.mxu0 0
      %1216 = vmatpush.bf16.msra.mxu0 0
      %1217 = vmatpush.bf16.msra.mxu0 0
      %1218 = vmatpush.bf16.msra.mxu0 0
      %1219 = vmatpush.bf16.msra.mxu0 0
      %1220 = vmatpush.bf16.msra.mxu0 %v1208
      %1221 = vmatpush.bf16.msra.mxu0 %v1207
      %1222 = vmatmul.bf16.gmra.mxu0 %v1212
      %v1223 = vpop.f32.mrf.mxu0
      %v1224 = vadd.f32 %v191, %v1223
      %v1225 = vpop.f32.mrf.mxu0
      %1226 = vdwg.mxu0
      %v1227 = vpack.c.bf16 %v1189, %v1189
      %s1228 = scalar_lea.vmem [#allocation11], 112
      %v1229 = vld [vmem:[%s1228] sm:$0xf]
      %v1230 = vld [vmem:[%s1228 + $0x4] sm:$0xf]
      %v1231 = vld [vmem:[%s1228 + $0x8] sm:$0xf]
      %v1232 = vld [vmem:[%s1228 + $0xc] sm:$0xf]
      %v1237 = vunpack.c.l.b16 %v1229
      %v1238 = vunpack.c.l.b16 %v1230
      %v1239 = vunpack.c.l.b16 %v1231
      %v1240 = vunpack.c.l.b16 %v1232
      %v1241 = vpack.c.b16 %v1238, %v1237
      %v1242 = vpack.c.b16 %v1240, %v1239
      %v1246 = vsel %vm207, %v1227, 0
      %1248 = vmatpush.bf16.msra.mxu0 0
      %1249 = vmatpush.bf16.msra.mxu0 0
      %1250 = vmatpush.bf16.msra.mxu0 0
      %1251 = vmatpush.bf16.msra.mxu0 0
      %1252 = vmatpush.bf16.msra.mxu0 0
      %1253 = vmatpush.bf16.msra.mxu0 0
      %1254 = vmatpush.bf16.msra.mxu0 %v1242
      %1255 = vmatpush.bf16.msra.mxu0 %v1241
      %1256 = vmatmul.bf16.gmra.mxu0 %v1246
      %v1257 = vpop.f32.mrf.mxu0
      %v1258 = vadd.f32 %v199, %v1257
      %v1259 = vpop.f32.mrf.mxu0
      %1260 = vdwg.mxu0
      %v1261 = vadd.f32 %v1224, %v1258
      %v1262 = vxor.u32 %v1261, 2147483648
      %v1263 = vmul.f32 %v1262, 1.442695
      %v1264 = vpow.pop %v1263
      %v1265 = vadd.f32 %v1264, 1.0
      %v1266 = vrcp.pop %v1265
      %v1267 = vmul.f32 %v1265, %v1266
      %v1268 = vsub.f32 1.0, %v1267
      %v1269 = vmul.f32 %v1266, %v1268
      %v1270 = vadd.f32 %v1266, %v1269
      %vm1271 = vweird.f32 %v1265
      %vm1272 = vweird.f32 %v1266
      %vm1273 = vmor %vm1271, %vm1272
      %v1274 = vsel %vm1273, %v1266, %v1270
      %v1275 = vand.u32 2147483647, %v1265
      %vm1276 = vcmp.eq.f32.partialorder %v1275, 8.507059e+37
      %v1277 = vand.u32 %v1265, 2147483648
      %v1278 = vor.u32 1.1754944e-38, %v1277
      %v1279 = vsel %vm1276, %v1278, %v1274
      %v1280 = vmul.f32 1.0, %v1279
      %1282 = vrot.lane.b32.xlu0 %v1258, 64
      %v1283 = vpop.permute.xlu0 %1282
      %v1285 = vmul.f32 %v1280, %v1283
      %1287 = vrot.lane.b32.xlu0 %v1285, 64
      %v1288 = vpop.permute.xlu0 %1287
      %v1290 = vadd.f32 %v1224, %v1288
      %v1291 = vtanh.pop %v1290
      %v1292 = vsub.f32 1.0, %v1280
      %1294 = vrot.lane.b32.xlu0 %v1291, 96
      %v1295 = vpop.permute.xlu0 %1294
      %v1297 = vmul.f32 %v1292, %v1295
      %v1299 = vperm.slane %v1189, 0
      %1300 = vrot.lane.b32.xlu0 %v1299, 32
      %v1301 = vpop.permute.xlu0 %1300
      %v1303 = vmul.f32 %v1280, %v1301
      %v1304 = vadd.f32 %v1297, %v1303
      %1306 = vrot.lane.b32.xlu0 %v1304, 96
      %v1307 = vpop.permute.xlu0 %1306
      %1309 = vst.msk [vmem:[%s1188] sm:$0x1] %vm164, %v1307
      %s1310 = scalar_lea.vmem [#allocation2], %s201
      %1311 = vst.msk [vmem:[%s1310] sm:$0x1] %vm164, %v1307
    $region82: #{tpu_custom_call.1} parent=1 // loop_footer
      %s205 = sadd.s32 1, %s201
    $region83: #{tpu_custom_call.1} parent=1 // loop_footer_branch
      %200 = sbr.rel target = $region79
    $region84: #{tpu_custom_call.1} parent=1 // loop_exit
      _
    %v1312 = vld [vmem:[#allocation2] sm:$0x3f]
    %v1313 = vpack.c.bf16 %v1312, %v1312
    %v1314 = vld [vmem:[%s10] sm:$0xf]
    %v1315 = vld [vmem:[%s10 + $0x4] sm:$0xf]
    %v1316 = vld [vmem:[%s10 + $0x8] sm:$0xf]
    %v1317 = vld [vmem:[%s10 + $0xc] sm:$0xf]
    %v1318 = vld [vmem:[%s11] sm:$0x1]
    %v1320 = vperm.slane %v1318, 0
    %v1326 = vunpack.c.l.b16 %v1314
    %v1327 = vunpack.c.l.b16 %v1315
    %v1328 = vunpack.c.l.b16 %v1316
    %v1329 = vunpack.c.l.b16 %v1317
    %v1330 = vpack.c.b16 %v1327, %v1326
    %v1331 = vpack.c.b16 %v1329, %v1328
    %vm1334 = vcmask 261120
    %v1336 = vsel %vm1334, %v1313, 0
    %1338 = vmatpush.bf16.msra.mxu0 0
    %1339 = vmatpush.bf16.msra.mxu0 0
    %1340 = vmatpush.bf16.msra.mxu0 0
    %1341 = vmatpush.bf16.msra.mxu0 0
    %1342 = vmatpush.bf16.msra.mxu0 0
    %1343 = vmatpush.bf16.msra.mxu0 0
    %1344 = vmatpush.bf16.msra.mxu0 %v1331
    %1345 = vmatpush.bf16.msra.mxu0 %v1330
    %1346 = vmatmul.bf16.gmra.mxu0 %v1336
    %v1347 = vpop.f32.mrf.mxu0
    %v1348 = vadd.f32 %v1320, %v1347
    %v1349 = vpop.f32.mrf.mxu0
    %1350 = vdwg.mxu0
    %vm1351 = vcmask 128000
    %v1352 = vsel %vm1351, %v1348, -inf
    %1353 = vmax.xlane.f32.xlu0 %v1352
    %v1354 = vpop.xlane.xlu0 %1353
    %v1355 = vsub.f32 %v1348, %v1354
    %v1356 = vmul.f32 %v1355, 1.442695
    %v1357 = vpow.pop %v1356
    %v1358 = vsel %vm1351, %v1357, 0.0
    %1359 = vadd.xlane.f32.xlu0 %v1358
    %v1360 = vpop.xlane.xlu0 %1359
    %v1361 = vlog2.pop %v1360
    %v1362 = vmul.f32 %v1361, 0.6931472
    %v1363 = vadd.f32 %v1354, %v1362
    %v1364 = vsub.f32 %v1348, %v1363
    %1365 = vst.msk [vmem:[#allocation15] sm:$0x3f] %vm1351, %v1364
    // Predicated region
    $region85: #{tpu_custom_call.1} parent=1 // pred_check
      _
    $region86: #{tpu_custom_call.1} parent=1 // pred_check_branch
      %1367 = sbr.rel (0) target = $region88
    $region87: #{tpu_custom_call.1} parent=1 // pred_region
      %1369 = vsyncadd [#allocation5], 0
      %s1371 = sshll.u32 [#allocation15], 4
      %s1372 = int_to_ptr.vmem [resolvable:$true] %s1371
      %s1373 = sshll.u32 %s12, 4
      %s1374 = int_to_ptr.hbm [resolvable:$true] %s1373
      %1376 = dma.vmem_to_hbm [thread:$0]  %s1372, 128, %s1374, [#allocation5]
    $region88: #{tpu_custom_call.1} parent=1 // pred_fallthru
      _
    // Predicated region
    $region89: #{tpu_custom_call.1} parent=1 // pred_check
      _
    $region90: #{tpu_custom_call.1} parent=1 // pred_check_branch
      %1378 = sbr.rel (0) target = $region92
    $region91: #{tpu_custom_call.1} parent=1 // pred_region
      %1380 = vsyncadd [#allocation17], 0
      %s1381 = sshll.u32 [#allocation16], 4
      %s1382 = int_to_ptr.vmem [resolvable:$true] %s1381
      %s1383 = sshll.u32 %s13, 4
      %s1384 = int_to_ptr.hbm [resolvable:$true] %s1383
      %1389 = dma.vmem_to_hbm [thread:$0]  %s1382, 128, %s1384, [#allocation17], 16, 16, 1
    $region92: #{tpu_custom_call.1} parent=1 // pred_fallthru
      _
    // Predicated region
    $region93: #{tpu_custom_call.1} parent=1 // pred_check
      _
    $region94: #{tpu_custom_call.1} parent=1 // pred_check_branch
      %1391 = sbr.rel (0) target = $region96
    $region95: #{tpu_custom_call.1} parent=1 // pred_region
      %1393 = vsyncadd [#allocation17], 0
      %s1395 = sshll.u32 [#allocation18], 4
      %s1396 = int_to_ptr.vmem [resolvable:$true] %s1395
      %s1397 = sshll.u32 %s14, 4
      %s1398 = int_to_ptr.hbm [resolvable:$true] %s1397
      %1400 = dma.vmem_to_hbm [thread:$0]  %s1396, 128, %s1398, [#allocation17]
    $region96: #{tpu_custom_call.1} parent=1 // pred_fallthru
      _
    // Predicated region
    $region97: #{tpu_custom_call.1} parent=1 // pred_check
      _
    $region98: #{tpu_custom_call.1} parent=1 // pred_check_branch
      %1402 = sbr.rel (0) target = $region100
    $region99: #{tpu_custom_call.1} parent=1 // pred_region
      %1404 = dma.done [#allocation5], 128
    $region100: #{tpu_custom_call.1} parent=1 // pred_fallthru
      _
    // Predicated region
    $region101: #{tpu_custom_call.1} parent=1 // pred_check
      _
    $region102: #{tpu_custom_call.1} parent=1 // pred_check_branch
      %1406 = sbr.rel (0) target = $region104
    $region103: #{tpu_custom_call.1} parent=1 // pred_region
      %1408 = dma.done [#allocation17], 128
    $region104: #{tpu_custom_call.1} parent=1 // pred_fallthru
      _
    // Predicated region
    $region105: #{tpu_custom_call.1} parent=1 // pred_check
      _
    $region106: #{tpu_custom_call.1} parent=1 // pred_check_branch
      %1410 = sbr.rel (0) target = $region108
    $region107: #{tpu_custom_call.1} parent=1 // pred_region
      %1412 = dma.done [#allocation17], 128
    $region108: #{tpu_custom_call.1} parent=1 // pred_fallthru
      _
    %1413 = vsyncpa [#allocation4], 1
    %1414 = vsyncpa [#allocation7], 1
    %1415 = vsyncpa [#allocation10], 1
    %1416 = vsyncpa [#allocation13], 1
    %1417 = vsyncpa [#allocation5], 1
    %1418 = vsyncpa [#allocation17], 1

</llo_original>
